<compile_context>
chip_gen: v7x
topology: tpu7x:2x2x1
jax: 0.10.0
libtpu: 0.0.40
codegen_flags: <defaults>
</compile_context>

<pallas_src>
import math

import jax
import jax.numpy as jnp
from jax.experimental import pallas as pl
from jax.experimental.pallas import tpu as pltpu

_LANE = 128
_SUBLANE = 8


def _round_up(x, m):
    return ((x + m - 1) // m) * m


def _vmem_capacity_bytes():
    """Per-core VMEM capacity; conservative fallback is v7x's 64 MiB/TC."""
    try:
        info = pltpu.get_tpu_info()
        cap = getattr(info, "vmem_capacity_bytes", None)
        if cap:
            return int(cap)
    except Exception:
        pass
    return 64 << 20


def _pick_m_tiling(m):
    """Return (tm, m_pad).  Prefer 512-row tiles (>=256); tiny M -> one tile."""
    if m <= 512:
        return m, m                      # full-dim block: legal for any m, no pad
    if m % 512 == 0:
        return 512, m
    if m % 256 == 0:
        return 256, m
    return 512, _round_up(m, 512)        # M-only row pad (cheap, rare)


# ----------------------------------------------------------------------------
# Kernels
# ----------------------------------------------------------------------------

def _logreg_kernel_resident(x_ref, w_ref, b_ref, o_ref):
    """Single-K-step case: whole (K, N_pad) weight resident in VMEM.

    x_ref: (tm, K)  w_ref: (K, Np)  b_ref: (1, Np)  o_ref: (tm, Np)
    No scratch, no pl.when -- direct MXU matmul with f32 accumulation.
    """
    acc = jnp.dot(x_ref[...], w_ref[...], preferred_element_type=jnp.float32)
    o_ref[...] = (acc + b_ref[...].astype(jnp.float32)).astype(o_ref.dtype)


def _make_ktiled_kernel(tk):
    """Huge-K case: x tiled over K (grid axis 1), full weight resident in VMEM
    via a constant-index BlockSpec; the K slab is sliced in-kernel."""

    def kernel(x_ref, w_ref, b_ref, o_ref, acc_ref):
        kk = pl.program_id(1)

        @pl.when(kk == 0)
        def _():
            acc_ref[...] = jnp.zeros_like(acc_ref)

        start = pl.multiple_of(kk * tk, tk)
        w_slab = w_ref[pl.ds(start, tk), :]
        acc_ref[...] += jnp.dot(x_ref[...], w_slab,
                                preferred_element_type=jnp.float32)

        @pl.when(kk == pl.num_programs(1) - 1)
        def _():
            o_ref[...] = (acc_ref[...] + b_ref[...].astype(jnp.float32)
                          ).astype(o_ref.dtype)

    return kernel


# ----------------------------------------------------------------------------
# Parameter init / prep (matches the PyTorch module: xavier_uniform_, zero bias)
# ----------------------------------------------------------------------------

def init_logreg_params(key, nfeat, nclass, dtype=jnp.float32):
    """Xavier-uniform weight (nclass, nfeat) [PyTorch layout], zero bias."""
    bound = math.sqrt(6.0 / (nfeat + nclass))
    weight = jax.random.uniform(
        key, (nclass, nfeat), dtype=dtype, minval=-bound, maxval=bound)
    bias = jnp.zeros((nclass,), dtype=dtype)
    return weight, bias


def prepare_logreg_params(weight, bias, dtype=jnp.bfloat16):
    """One-time prep: transpose to (K, N) and zero-pad only N (classes) to a
    lane-dense multiple of 128.  K is left exact -- the kernel uses full-K
    resident weight blocks, so unaligned nfeat never forces an x copy.

    Defaults to bf16 storage (halves HBM traffic on v6e/v7x; accumulation in
    the kernel stays f32).  Pass dtype=jnp.float32 for full-precision params.
    """
    nclass, nfeat = weight.shape
    n_pad = _round_up(nclass, _LANE)
    w_kn = jnp.zeros((nfeat, n_pad), dtype=dtype)
    w_kn = w_kn.at[:, :nclass].set(weight.T.astype(dtype))
    b2 = jnp.zeros((1, n_pad), dtype=dtype)
    b2 = b2.at[0, :nclass].set(bias.astype(dtype))
    return w_kn, b2
    # TODO(synk): optional fp8 weight/x quantization for v7x (bf16+fp8 MXU),
    # gated behind an accuracy check.


# ----------------------------------------------------------------------------
# Forward
# ----------------------------------------------------------------------------

def logreg_forward(x, w_kn, b2, nclass, *, min_pallas_rows=16):
    """x: (M, nfeat); w_kn: (nfeat, N_pad) pre-transposed, lane-dense N;
    b2: (1, N_pad).  Returns (M, nclass) in x's dtype."""
    m, k = x.shape
    kw, n_pad = w_kn.shape
    assert kw == k and nclass <= n_pad

    out_dtype = x.dtype
    # Feed the MXU the weight dtype (bf16 by default).  If the caller already
    # holds bf16 activations this is a no-op; otherwise it is a cheap cast.
    x_in = x if x.dtype == w_kn.dtype else x.astype(w_kn.dtype)

    # Tiny problems: a Pallas launch cannot win -- let XLA fuse it.
    if m < min_pallas_rows:
        y = jnp.dot(x_in, w_kn, preferred_element_type=jnp.float32)
        y = y + b2.astype(jnp.float32)
        return y[:, :nclass].astype(out_dtype)

    tm, m_pad = _pick_m_tiling(m)

    xb = jnp.dtype(x_in.dtype).itemsize
    wb = jnp.dtype(w_kn.dtype).itemsize
    ob = jnp.dtype(out_dtype).itemsize

    cap = _vmem_capacity_bytes()
    budget = int(0.65 * cap)   # leave headroom for Mosaic internal scratch

    # Conservative plan size for the resident-weight path (count 2 buffers for
    # everything even though the constant-index weight is fetched only once).
    resident_need = (2 * tm * k * xb        # x tiles (double-buffered)
                     + 2 * k * n_pad * wb   # resident weight
                     + 2 * tm * n_pad * ob  # output tiles
                     + 2 * n_pad * wb)      # bias

    if resident_need <= budget:
        # ------------------------- Path A: resident weight, no K grid axis ---
        if m_pad != m:
            x_in = jnp.pad(x_in, ((0, m_pad - m), (0, 0)))  # rows only
        grid = (m_pad // tm,)
        vmem_limit = int(min(max(2 * resident_need, 16 << 20), budget))

        out = pl.pallas_call(
            _logreg_kernel_resident,
            out_shape=jax.ShapeDtypeStruct((m_pad, n_pad), out_dtype),
            grid_spec=pltpu.PrefetchScalarGridSpec(
                num_scalar_prefetch=0,
                grid=grid,
                in_specs=[
                    pl.BlockSpec((tm, k), lambda i: (i, 0)),
                    pl.BlockSpec((k, n_pad), lambda i: (0, 0)),   # resident
                    pl.BlockSpec((1, n_pad), lambda i: (0, 0)),   # resident
                ],
                out_specs=pl.BlockSpec((tm, n_pad), lambda i: (i, 0)),
            ),
            compiler_params=pltpu.CompilerParams(
                # v7x: flip to pltpu.CORE_PARALLEL if profiling shows one TC idle.
                dimension_semantics=("parallel",),
                vmem_limit_bytes=vmem_limit,
            ),
            cost_estimate=pl.CostEstimate(
                flops=2 * m_pad * k * n_pad,
                transcendentals=0,
                bytes_accessed=m_pad * k * xb + k * n_pad * wb
                + m_pad * n_pad * ob,
            ),
        )(x_in, w_kn, b2)
    else:
        # ------------------ Path B: huge K -- tile x over K, weight resident --
        tk = 2048
        k_pad = _round_up(k, tk)
        tiled_need = (2 * tm * tk * xb
                      + 2 * k_pad * n_pad * wb
                      + 2 * tm * n_pad * ob
                      + tm * n_pad * 4        # f32 accumulator scratch
                      + 2 * n_pad * wb)
        if tiled_need > budget:
            # Absurdly large K: hand it back to XLA rather than mis-tile.
            y = jnp.dot(x_in, w_kn, preferred_element_type=jnp.float32)
            y = y + b2.astype(jnp.float32)
            return y[:, :nclass].astype(out_dtype)

        if m_pad != m:
            x_in = jnp.pad(x_in, ((0, m_pad - m), (0, 0)))
        if k_pad != k:
            # TODO(synk): a masked last-K-tile would avoid this rare-path copy.
            x_in = jnp.pad(x_in, ((0, 0), (0, k_pad - k)))
            w_in = jnp.pad(w_kn, ((0, k_pad - k), (0, 0)))
        else:
            w_in = w_kn

        grid = (m_pad // tm, k_pad // tk)
        vmem_limit = int(min(max(2 * tiled_need, 16 << 20), budget))

        out = pl.pallas_call(
            _make_ktiled_kernel(tk),
            out_shape=jax.ShapeDtypeStruct((m_pad, n_pad), out_dtype),
            grid_spec=pltpu.PrefetchScalarGridSpec(
                num_scalar_prefetch=0,
                grid=grid,
                in_specs=[
                    pl.BlockSpec((tm, tk), lambda i, kk: (i, kk)),
                    pl.BlockSpec((k_pad, n_pad), lambda i, kk: (0, 0)),  # resident
                    pl.BlockSpec((1, n_pad), lambda i, kk: (0, 0)),
                ],
                out_specs=pl.BlockSpec((tm, n_pad), lambda i, kk: (i, 0)),
                scratch_shapes=[pltpu.VMEM((tm, n_pad), jnp.float32)],
            ),
            compiler_params=pltpu.CompilerParams(
                dimension_semantics=("parallel", "arbitrary"),
                vmem_limit_bytes=vmem_limit,
            ),
            cost_estimate=pl.CostEstimate(
                flops=2 * m_pad * k_pad * n_pad,
                transcendentals=0,
                bytes_accessed=m_pad * k_pad * xb + k_pad * n_pad * wb
                + m_pad * n_pad * ob,
            ),
        )(x_in, w_in, b2)

    # TODO(synk): if the consumer is softmax/argmax over classes, keep the
    # lane-dense (M, n_pad) output (or fuse the consumer) instead of slicing.
    return out[:m, :nclass]


if __name__ == "__main__":
    key = jax.random.PRNGKey(0)
    k_x, k_w = jax.random.split(key)

    # Small but non-toy shapes: 2 row tiles of 512 (no M pad), unaligned
    # nfeat=384 handled with zero x-padding via the full-K resident weight,
    # lane-dense class padding 10 -> 128 sliced off at the end.
    batch, nfeat, nclass = 1024, 384, 10
    x = jax.random.normal(k_x, (batch, nfeat), dtype=jnp.float32)

    weight, bias = init_logreg_params(k_w, nfeat, nclass)   # PyTorch layout
    w_kn, b2 = prepare_logreg_params(weight, bias)           # bf16, (K, N_pad)

    out = logreg_forward(x, w_kn, b2, nclass)
    out = jax.block_until_ready(out)

    # Correctness vs a high-precision f32 reference.  Tolerances account for
    # bf16 operands (documented above); accumulation is f32 in-kernel.
    ref = jnp.dot(x, weight.T, precision=jax.lax.Precision.HIGHEST) + bias
    assert out.shape == (batch, nclass)
    max_err = float(jnp.max(jnp.abs(out.astype(jnp.float32) - ref)))
    assert jnp.allclose(out.astype(jnp.float32), ref, atol=5e-2, rtol=5e-2), max_err

    print("KERNEL_OK")
</pallas_src>

<mosaic_0001>
module attributes {stable_mosaic.version = 11 : i64} {
  func.func @_logreg_kernel_resident(%arg0: i32, %arg1: memref<512x384xbf16, #tpu.memory_space<vmem>>, %arg2: memref<384x128xbf16, #tpu.memory_space<vmem>>, %arg3: memref<1x128xbf16, #tpu.memory_space<vmem>>, %arg4: memref<512x128xf32, #tpu.memory_space<vmem>>) attributes {dimension_semantics = [#tpu.dimension_semantics<parallel>], iteration_bounds = array<i64: 2>, scalar_prefetch = 0 : i64, scratch_operands = 0 : i64, tpu.core_type = #tpu.core_type<tc>, window_params = [{transform_indices = @transform_0, window_bounds = array<i64: 512, 384>}, {pipeline_mode = #tpu.pipeline_mode<synchronous>, transform_indices = @transform_1, window_bounds = array<i64: 384, 128>}, {pipeline_mode = #tpu.pipeline_mode<synchronous>, transform_indices = @transform_2, window_bounds = array<i64: 1, 128>}, {transform_indices = @transform_3, window_bounds = array<i64: 512, 128>}]} {
    %c0 = arith.constant 0 : index
    %c0_0 = arith.constant 0 : index
    %0 = vector.load %arg1[%c0, %c0_0] : memref<512x384xbf16, #tpu.memory_space<vmem>>, vector<512x384xbf16>
    %c0_1 = arith.constant 0 : index
    %c0_2 = arith.constant 0 : index
    %1 = vector.load %arg2[%c0_1, %c0_2] : memref<384x128xbf16, #tpu.memory_space<vmem>>, vector<384x128xbf16>
    %cst = arith.constant dense<0.000000e+00> : vector<512x128xf32>
    %2 = tpu.matmul %0, %1, %cst {dimension_numbers = #tpu.dot_dimension_numbers<[1], [0], [0], [1], [0, 0, 1, 1], [], []>} : vector<512x384xbf16>, vector<384x128xbf16>, vector<512x128xf32> -> vector<512x128xf32>
    %c0_3 = arith.constant 0 : index
    %c0_4 = arith.constant 0 : index
    %3 = vector.load %arg3[%c0_3, %c0_4] : memref<1x128xbf16, #tpu.memory_space<vmem>>, vector<1x128xbf16>
    %4 = arith.extf %3 : vector<1x128xbf16> to vector<1x128xf32>
    %5 = vector.broadcast %4 : vector<1x128xf32> to vector<512x128xf32>
    %6 = arith.addf %2, %5 : vector<512x128xf32>
    %c0_5 = arith.constant 0 : index
    %c0_6 = arith.constant 0 : index
    %7 = vector.load %arg4[%c0_5, %c0_6] : memref<512x128xf32, #tpu.memory_space<vmem>>, vector<512x128xf32>
    tpu.vector_store %arg4[%c0_5, %c0_6], %6 {strides = array<i32>} : memref<512x128xf32, #tpu.memory_space<vmem>>, vector<512x128xf32>,
    return
  }
  func.func @transform_0(%arg0: i32) -> (i32, i32) {
    %c0_i32 = arith.constant 0 : i32
    %c0_i32_0 = arith.constant 0 : i32
    return %arg0, %c0_i32 : i32, i32
  }
  func.func @transform_1(%arg0: i32) -> (i32, i32) {
    %c0_i32 = arith.constant 0 : i32
    %c0_i32_0 = arith.constant 0 : i32
    %c0_i32_1 = arith.constant 0 : i32
    return %c0_i32, %c0_i32_0 : i32, i32
  }
  func.func @transform_2(%arg0: i32) -> (i32, i32) {
    %c0_i32 = arith.constant 0 : i32
    %c0_i32_0 = arith.constant 0 : i32
    %c0_i32_1 = arith.constant 0 : i32
    return %c0_i32, %c0_i32_0 : i32, i32
  }
  func.func @transform_3(%arg0: i32) -> (i32, i32) {
    %c0_i32 = arith.constant 0 : i32
    %c0_i32_0 = arith.constant 0 : i32
    return %arg0, %c0_i32 : i32, i32
  }
}

</mosaic_0001>

<llo_original>
// kernel: tpu_custom_call.1
$region0: #{tpu_custom_call.1}
  #allocation0 [shape = 'u32[]', space=smem, size = 0x4, offset = 0x4, fixed_abs, tag = 'smem constant byte address 0x4 - core index']
  #allocation1 [shape = 'u32[144,128]{1,0:T(1,128)}', space=vmem, size = 0x12000, scoped, tag = 'internal scratch']
  %s0 = inlined_call_operand.hbm [shape: bf16[1024,384], index: 0, kind: input, shape index: {}]
  %s1 = inlined_call_operand.hbm [shape: bf16[384,128], index: 1, kind: input, shape index: {}]
  %s2 = inlined_call_operand.vmem [shape: bf16[1,128], index: 2, kind: input, shape index: {}]
  %s3 = inlined_call_operand.hbm [shape: f32[1024,128], index: 3, kind: output, shape index: {}]
  %s4 = sld [smem:[#allocation0]]
  $region53: #{tpu_custom_call.1} parent=0
    _
  %s6 = ssub.s32 1, %s4
  %s7 = scalar_select 0, %s6, %s4
  $region1: #{tpu_custom_call.1} parent=0
    #allocation2 [shape = 'u8[786432]{0}', space=vmem, size = 0xc0000, scoped, tag = 'input window, operand 0']
    #allocation3 [shape = 's32[2]{0}', space=sflag, size = 0x8, scoped, tag = 'scoped memory for tpu_custom_call.1']
    #allocation4 [shape = 's32[2]{0}', space=sflag, size = 0x8, scoped, tag = 'scoped memory for tpu_custom_call.1']
    #allocation5 [shape = 'u8[98304]{0}', space=vmem, size = 0x18000, scoped, tag = 'input window, operand 1, single buffered']
    #allocation6 [shape = 's32[1]{0}', space=sflag, size = 0x4, scoped, tag = 'scoped memory for tpu_custom_call.1']
    #allocation7 [shape = 'u8[524288]{0}', space=vmem, size = 0x80000, scoped, tag = 'output window, operand 0']
    %8 = vsyncpa [#allocation3], 0
    %s9 = scalar_lea.sflag [#allocation3], 1
    %10 = vsyncpa %s9, 0
    %11 = vsyncpa [#allocation6], 0
    %12 = vsyncpa [#allocation4], 0
    %s13 = scalar_lea.sflag [#allocation4], 1
    %14 = vsyncpa %s13, 0
    loop: start=0, step=1, limit=4
    $region2: #{tpu_custom_call.1} parent=1 // loop_pre_header
      _
    $region3: #{tpu_custom_call.1} parent=1 // loop_header
      %s16 = sphi 0, %s20
      %p17 = scmp.ge.s32.totalorder %s16, 4
      %s26 = sphi 0, %s28
      %s29 = sphi 0, %s26
      %s30 = sphi 0, %s29
      %s46 = sphi 0, %s30
      %s50 = sphi 0, %s50
      %s52 = sphi 0, %s50
      %s53 = sphi 0, %s52
      %s67 = sphi 0, %s53
      %s71 = sphi 0, %s71
      %s73 = sphi 0, %s71
      %s74 = sphi 0, %s73
      %s88 = sphi 0, %s74
      %s94 = sphi 0, %s96
      %s97 = sphi 0, %s94
      %s98 = sphi 0, %s97
      %s114 = sphi 0, %s98
    $region4: #{tpu_custom_call.1} parent=1 // loop_header_branch
      %19 = sbr.rel (%p17) target = $region8
    $region5: #{tpu_custom_call.1} parent=1 // loop_body
      %s21 = ssub.s32 %s16, 1
      %s22 = ssub.s32 %s16, 2
      %s23 = sadd.s32 %s16, 1
      %s24 = ssub.s32 %s16, %s23
      %p25 = scmp.eq.s32.totalorder %s24, 0
      %s27 = sadd.s32 %s26, 1
      %s28 = scalar_select %p25, %s26, %s27
      %p31 = pneg %p25
      %p32 = scmp.eq.s32.totalorder %s16, 1
      %p33 = por %p31, %p32
      %p34 = scmp.ne.s32.totalorder %s26, %s29
      %p35 = scmp.eq.s32.totalorder %s16, 0
      %p36 = por %p34, %p35
      %p37 = scmp.ne.s32.totalorder %s26, %s29
      %p38 = scmp.eq.s32.totalorder %s21, 1
      %p39 = por %p37, %p38
      %p40 = scmp.ne.s32.totalorder %s29, %s30
      %p41 = scmp.eq.s32.totalorder %s21, 0
      %p42 = por %p40, %p41
      %p43 = scmp.ne.s32.totalorder %s29, %s30
      %p44 = scmp.eq.s32.totalorder %s22, 1
      %p45 = por %p43, %p44
      %p47 = scmp.ne.s32.totalorder %s30, %s46
      %p48 = scmp.eq.s32.totalorder %s22, 0
      %p49 = por %p47, %p48
      %s51 = sadd.s32 %s50, 1
      %p54 = scmp.eq.s32.totalorder %s16, 1
      %p55 = scmp.ne.s32.totalorder %s50, %s52
      %p56 = scmp.eq.s32.totalorder %s16, 0
      %p57 = por %p55, %p56
      %p58 = scmp.ne.s32.totalorder %s50, %s52
      %p59 = scmp.eq.s32.totalorder %s21, 1
      %p60 = por %p58, %p59
      %p61 = scmp.ne.s32.totalorder %s52, %s53
      %p62 = scmp.eq.s32.totalorder %s21, 0
      %p63 = por %p61, %p62
      %p64 = scmp.ne.s32.totalorder %s52, %s53
      %p65 = scmp.eq.s32.totalorder %s22, 1
      %p66 = por %p64, %p65
      %p68 = scmp.ne.s32.totalorder %s53, %s67
      %p69 = scmp.eq.s32.totalorder %s22, 0
      %p70 = por %p68, %p69
      %s72 = sadd.s32 %s71, 1
      %p75 = scmp.eq.s32.totalorder %s16, 1
      %p76 = scmp.ne.s32.totalorder %s71, %s73
      %p77 = scmp.eq.s32.totalorder %s16, 0
      %p78 = por %p76, %p77
      %p79 = scmp.ne.s32.totalorder %s71, %s73
      %p80 = scmp.eq.s32.totalorder %s21, 1
      %p81 = por %p79, %p80
      %p82 = scmp.ne.s32.totalorder %s73, %s74
      %p83 = scmp.eq.s32.totalorder %s21, 0
      %p84 = por %p82, %p83
      %p85 = scmp.ne.s32.totalorder %s73, %s74
      %p86 = scmp.eq.s32.totalorder %s22, 1
      %p87 = por %p85, %p86
      %p89 = scmp.ne.s32.totalorder %s74, %s88
      %p90 = scmp.eq.s32.totalorder %s22, 0
      %p91 = por %p89, %p90
      %s92 = ssub.s32 %s16, %s23
      %p93 = scmp.eq.s32.totalorder %s92, 0
      %s95 = sadd.s32 %s94, 1
      %s96 = scalar_select %p93, %s94, %s95
      %p99 = pneg %p93
      %p100 = scmp.eq.s32.totalorder %s16, 1
      %p101 = por %p99, %p100
      %p102 = scmp.ne.s32.totalorder %s94, %s97
      %p103 = scmp.eq.s32.totalorder %s16, 0
      %p104 = por %p102, %p103
      %p105 = scmp.ne.s32.totalorder %s94, %s97
      %p106 = scmp.eq.s32.totalorder %s21, 1
      %p107 = por %p105, %p106
      %p108 = scmp.ne.s32.totalorder %s97, %s98
      %p109 = scmp.eq.s32.totalorder %s21, 0
      %p110 = por %p108, %p109
      %p111 = scmp.ne.s32.totalorder %s97, %s98
      %p112 = scmp.eq.s32.totalorder %s22, 1
      %p113 = por %p111, %p112
      %p115 = scmp.ne.s32.totalorder %s98, %s114
      %p116 = scmp.eq.s32.totalorder %s22, 0
      %p117 = por %p115, %p116
      %p118 = scmp.le.s32.totalorder 1, %s16
      %p119 = scmp.lt.s32.totalorder %s16, 3
      %p120 = pnand %p118, %p119
      %p121 = pneg %p120
      // Predicated region
      $region9: #{tpu_custom_call.1} parent=5 // pred_check
        _
      $region10: #{tpu_custom_call.1} parent=5 // pred_check_branch
        %123 = sbr.rel (%p120) target = $region12
      $region11: #{tpu_custom_call.1} parent=5 // pred_region
        %s124 = ssub.s32 %s16, 1
        // Predicated region
        $region13: #{tpu_custom_call.1} parent=11 // pred_check
          %p125 = pneg %p63
        $region14: #{tpu_custom_call.1} parent=11 // pred_check_branch
          %127 = sbr.rel (%p125) target = $region16
        $region15: #{tpu_custom_call.1} parent=11 // pred_region
          %s129 = ssub.s32 3072, 3072
          %130 = vsyncadd [#allocation6], %s129
          %s131 = sshll.u32 [#allocation5], 4
          %s132 = int_to_ptr.vmem [resolvable:$true] %s131
          %137 = dma.hbm_to_vmem [thread:$0]  %s1, 3072, %s132, [#allocation6], 64, 64, 4
        $region16: #{tpu_custom_call.1} parent=11 // pred_fallthru
          _
        // Predicated region
        $region17: #{tpu_custom_call.1} parent=11 // pred_check
          %p138 = pneg %p84
        $region18: #{tpu_custom_call.1} parent=11 // pred_check_branch
          %140 = sbr.rel (%p138) target = $region20
        $region19: #{tpu_custom_call.1} parent=11 // pred_region
          _
        $region20: #{tpu_custom_call.1} parent=11 // pred_fallthru
          _
      $region12: #{tpu_custom_call.1} parent=5 // pred_fallthru
        _
      %p141 = scmp.lt.s32.totalorder %s16, 2
      // Predicated region
      $region21: #{tpu_custom_call.1} parent=5 // pred_check
        %p142 = pneg %p141
      $region22: #{tpu_custom_call.1} parent=5 // pred_check_branch
        %144 = sbr.rel (%p142) target = $region24
      $region23: #{tpu_custom_call.1} parent=5 // pred_region
        // Predicated region
        $region25: #{tpu_custom_call.1} parent=23 // pred_check
          %p145 = pneg %p36
        $region26: #{tpu_custom_call.1} parent=23 // pred_check_branch
          %147 = sbr.rel (%p145) target = $region28
        $region27: #{tpu_custom_call.1} parent=23 // pred_region
          %s148 = sand.u32 %s26, 1
          %s149 = scalar_lea.sflag [#allocation3], %s148
          %s150 = sand.u32 %s26, 1
          %s151 = smul.addr %s150, 768
          %s152 = scalar_lea.vmem [#allocation2], %s151
          %s153 = smul.u32 64, %s16
          %s155 = ssub.s32 12288, 12288
          %156 = vsyncadd %s149, %s155
          %s157 = smul.addr %s153, 3
          %s158 = smul.addr %s157, 64
          %s159 = scalar_lea.hbm %s0, %s158
          %s160 = sshll.u32 %s152, 4
          %s161 = int_to_ptr.vmem [resolvable:$true] %s160
          %166 = dma.hbm_to_vmem [thread:$0]  %s159, 12288, %s161, %s149, 192, 192, 12
        $region28: #{tpu_custom_call.1} parent=23 // pred_fallthru
          _
      $region24: #{tpu_custom_call.1} parent=5 // pred_fallthru
        _
      %p167 = scmp.le.s32.totalorder 1, %s16
      %p168 = scmp.lt.s32.totalorder %s16, 3
      %p169 = pnand %p167, %p168
      %p170 = pneg %p169
      // Predicated region
      $region29: #{tpu_custom_call.1} parent=5 // pred_check
        _
      $region30: #{tpu_custom_call.1} parent=5 // pred_check_branch
        %172 = sbr.rel (%p169) target = $region32
      $region31: #{tpu_custom_call.1} parent=5 // pred_region
        %s173 = ssub.s32 %s16, 1
        %s174 = sand.u32 %s29, 1
        %s175 = scalar_lea.sflag [#allocation3], %s174
        %s176 = sand.u32 %s29, 1
        %s177 = smul.addr %s176, 768
        %s178 = scalar_lea.vmem [#allocation2], %s177
        // Predicated region
        $region33: #{tpu_custom_call.1} parent=31 // pred_check
          %p179 = pneg %p42
        $region34: #{tpu_custom_call.1} parent=31 // pred_check_branch
          %181 = sbr.rel (%p179) target = $region36
        $region35: #{tpu_custom_call.1} parent=31 // pred_region
          %182 = dma.done %s175, 12288
        $region36: #{tpu_custom_call.1} parent=31 // pred_fallthru
          _
        // Predicated region
        $region37: #{tpu_custom_call.1} parent=31 // pred_check
          %p183 = pneg %p63
        $region38: #{tpu_custom_call.1} parent=31 // pred_check_branch
          %185 = sbr.rel (%p183) target = $region40
        $region39: #{tpu_custom_call.1} parent=31 // pred_region
          %186 = dma.done [#allocation6], 3072
        $region40: #{tpu_custom_call.1} parent=31 // pred_fallthru
          _
        %s187 = sand.u32 %s29, 1
        %s188 = scalar_lea.sflag [#allocation3], %s187
        %s189 = sand.u32 %s29, 1
        %s190 = smul.addr %s189, 768
        %s191 = scalar_lea.vmem [#allocation2], %s190
        %p192 = pneg %p42
        %p193 = pneg %p39
        %p194 = pneg %p63
        %p195 = pneg %p60
        %p196 = pneg %p84
        %p197 = pneg %p81
        %p198 = pneg %p110
        %p199 = pneg %p107
        %s200 = sand.u32 %s97, 1
        %s201 = scalar_lea.sflag [#allocation4], %s200
        %s202 = sand.u32 %s97, 1
        %s203 = smul.addr %s202, 512
        %s204 = scalar_lea.vmem [#allocation7], %s203
        %s205 = smul.u32 64, %s21
        %s206 = smul.u32 64, %s21
        %v208 = vld [vmem:[%s178] sm:$0xff]
        %v209 = vld [vmem:[%s178 + $0x8] sm:$0xf]
        %v210 = vld [vmem:[%s178 + $0xc] sm:$0xff]
        %v211 = vld [vmem:[%s178 + $0x14] sm:$0xf]
        %v212 = vld [vmem:[%s178 + $0x18] sm:$0xff]
        %v213 = vld [vmem:[%s178 + $0x20] sm:$0xf]
        %v214 = vld [vmem:[%s178 + $0x24] sm:$0xff]
        %v215 = vld [vmem:[%s178 + $0x2c] sm:$0xf]
        %v216 = vld [vmem:[%s178 + $0x30] sm:$0xff]
        %v217 = vld [vmem:[%s178 + $0x38] sm:$0xf]
        %v218 = vld [vmem:[%s178 + $0x3c] sm:$0xff]
        %v219 = vld [vmem:[%s178 + $0x44] sm:$0xf]
        %v220 = vld [vmem:[%s178 + $0x48] sm:$0xff]
        %v221 = vld [vmem:[%s178 + $0x50] sm:$0xf]
        %v222 = vld [vmem:[%s178 + $0x54] sm:$0xff]
        %v223 = vld [vmem:[%s178 + $0x5c] sm:$0xf]
        %v224 = vld [vmem:[%s178 + $0x60] sm:$0xff]
        %v225 = vld [vmem:[%s178 + $0x68] sm:$0xf]
        %v226 = vld [vmem:[%s178 + $0x6c] sm:$0xff]
        %v227 = vld [vmem:[%s178 + $0x74] sm:$0xf]
        %v228 = vld [vmem:[%s178 + $0x78] sm:$0xff]
        %v229 = vld [vmem:[%s178 + $0x80] sm:$0xf]
        %v230 = vld [vmem:[%s178 + $0x84] sm:$0xff]
        %v231 = vld [vmem:[%s178 + $0x8c] sm:$0xf]
        %v232 = vld [vmem:[%s178 + $0x90] sm:$0xff]
        %v233 = vld [vmem:[%s178 + $0x98] sm:$0xf]
        %v234 = vld [vmem:[%s178 + $0x9c] sm:$0xff]
        %v235 = vld [vmem:[%s178 + $0xa4] sm:$0xf]
        %v236 = vld [vmem:[%s178 + $0xa8] sm:$0xff]
        %v237 = vld [vmem:[%s178 + $0xb0] sm:$0xf]
        %v238 = vld [vmem:[%s178 + $0xb4] sm:$0xff]
        %v239 = vld [vmem:[%s178 + $0xbc] sm:$0xf]
        %v240 = vld [vmem:[%s178 + $0xc0] sm:$0xff]
        %v241 = vld [vmem:[%s178 + $0xc8] sm:$0xf]
        %v242 = vld [vmem:[%s178 + $0xcc] sm:$0xff]
        %v243 = vld [vmem:[%s178 + $0xd4] sm:$0xf]
        %v244 = vld [vmem:[%s178 + $0xd8] sm:$0xff]
        %v245 = vld [vmem:[%s178 + $0xe0] sm:$0xf]
        %v246 = vld [vmem:[%s178 + $0xe4] sm:$0xff]
        %v247 = vld [vmem:[%s178 + $0xec] sm:$0xf]
        %v248 = vld [vmem:[%s178 + $0xf0] sm:$0xff]
        %v249 = vld [vmem:[%s178 + $0xf8] sm:$0xf]
        %v250 = vld [vmem:[%s178 + $0xfc] sm:$0xff]
        %v251 = vld [vmem:[%s178 + $0x104] sm:$0xf]
        %v252 = vld [vmem:[%s178 + $0x108] sm:$0xff]
        %v253 = vld [vmem:[%s178 + $0x110] sm:$0xf]
        %v254 = vld [vmem:[%s178 + $0x114] sm:$0xff]
        %v255 = vld [vmem:[%s178 + $0x11c] sm:$0xf]
        %v256 = vld [vmem:[%s178 + $0x120] sm:$0xff]
        %v257 = vld [vmem:[%s178 + $0x128] sm:$0xf]
        %v258 = vld [vmem:[%s178 + $0x12c] sm:$0xff]
        %v259 = vld [vmem:[%s178 + $0x134] sm:$0xf]
        %v260 = vld [vmem:[%s178 + $0x138] sm:$0xff]
        %v261 = vld [vmem:[%s178 + $0x140] sm:$0xf]
        %v262 = vld [vmem:[%s178 + $0x144] sm:$0xff]
        %v263 = vld [vmem:[%s178 + $0x14c] sm:$0xf]
        %v264 = vld [vmem:[%s178 + $0x150] sm:$0xff]
        %v265 = vld [vmem:[%s178 + $0x158] sm:$0xf]
        %v266 = vld [vmem:[%s178 + $0x15c] sm:$0xff]
        %v267 = vld [vmem:[%s178 + $0x164] sm:$0xf]
        %v268 = vld [vmem:[%s178 + $0x168] sm:$0xff]
        %v269 = vld [vmem:[%s178 + $0x170] sm:$0xf]
        %v270 = vld [vmem:[%s178 + $0x174] sm:$0xff]
        %v271 = vld [vmem:[%s178 + $0x17c] sm:$0xf]
        %v272 = vld [vmem:[%s178 + $0x180] sm:$0xff]
        %v273 = vld [vmem:[%s178 + $0x188] sm:$0xf]
        %v274 = vld [vmem:[%s178 + $0x18c] sm:$0xff]
        %v275 = vld [vmem:[%s178 + $0x194] sm:$0xf]
        %v276 = vld [vmem:[%s178 + $0x198] sm:$0xff]
        %v277 = vld [vmem:[%s178 + $0x1a0] sm:$0xf]
        %v278 = vld [vmem:[%s178 + $0x1a4] sm:$0xff]
        %v279 = vld [vmem:[%s178 + $0x1ac] sm:$0xf]
        %v280 = vld [vmem:[%s178 + $0x1b0] sm:$0xff]
        %v281 = vld [vmem:[%s178 + $0x1b8] sm:$0xf]
        %v282 = vld [vmem:[%s178 + $0x1bc] sm:$0xff]
        %v283 = vld [vmem:[%s178 + $0x1c4] sm:$0xf]
        %v284 = vld [vmem:[%s178 + $0x1c8] sm:$0xff]
        %v285 = vld [vmem:[%s178 + $0x1d0] sm:$0xf]
        %v286 = vld [vmem:[%s178 + $0x1d4] sm:$0xff]
        %v287 = vld [vmem:[%s178 + $0x1dc] sm:$0xf]
        %v288 = vld [vmem:[%s178 + $0x1e0] sm:$0xff]
        %v289 = vld [vmem:[%s178 + $0x1e8] sm:$0xf]
        %v290 = vld [vmem:[%s178 + $0x1ec] sm:$0xff]
        %v291 = vld [vmem:[%s178 + $0x1f4] sm:$0xf]
        %v292 = vld [vmem:[%s178 + $0x1f8] sm:$0xff]
        %v293 = vld [vmem:[%s178 + $0x200] sm:$0xf]
        %v294 = vld [vmem:[%s178 + $0x204] sm:$0xff]
        %v295 = vld [vmem:[%s178 + $0x20c] sm:$0xf]
        %v296 = vld [vmem:[%s178 + $0x210] sm:$0xff]
        %v297 = vld [vmem:[%s178 + $0x218] sm:$0xf]
        %v298 = vld [vmem:[%s178 + $0x21c] sm:$0xff]
        %v299 = vld [vmem:[%s178 + $0x224] sm:$0xf]
        %v300 = vld [vmem:[%s178 + $0x228] sm:$0xff]
        %v301 = vld [vmem:[%s178 + $0x230] sm:$0xf]
        %v302 = vld [vmem:[%s178 + $0x234] sm:$0xff]
        %v303 = vld [vmem:[%s178 + $0x23c] sm:$0xf]
        %v304 = vld [vmem:[%s178 + $0x240] sm:$0xff]
        %v305 = vld [vmem:[%s178 + $0x248] sm:$0xf]
        %v306 = vld [vmem:[%s178 + $0x24c] sm:$0xff]
        %v307 = vld [vmem:[%s178 + $0x254] sm:$0xf]
        %v308 = vld [vmem:[%s178 + $0x258] sm:$0xff]
        %v309 = vld [vmem:[%s178 + $0x260] sm:$0xf]
        %v310 = vld [vmem:[%s178 + $0x264] sm:$0xff]
        %v311 = vld [vmem:[%s178 + $0x26c] sm:$0xf]
        %v312 = vld [vmem:[%s178 + $0x270] sm:$0xff]
        %v313 = vld [vmem:[%s178 + $0x278] sm:$0xf]
        %v314 = vld [vmem:[%s178 + $0x27c] sm:$0xff]
        %v315 = vld [vmem:[%s178 + $0x284] sm:$0xf]
        %v316 = vld [vmem:[%s178 + $0x288] sm:$0xff]
        %v317 = vld [vmem:[%s178 + $0x290] sm:$0xf]
        %v318 = vld [vmem:[%s178 + $0x294] sm:$0xff]
        %v319 = vld [vmem:[%s178 + $0x29c] sm:$0xf]
        %v320 = vld [vmem:[%s178 + $0x2a0] sm:$0xff]
        %v321 = vld [vmem:[%s178 + $0x2a8] sm:$0xf]
        %v322 = vld [vmem:[%s178 + $0x2ac] sm:$0xff]
        %v323 = vld [vmem:[%s178 + $0x2b4] sm:$0xf]
        %v324 = vld [vmem:[%s178 + $0x2b8] sm:$0xff]
        %v325 = vld [vmem:[%s178 + $0x2c0] sm:$0xf]
        %v326 = vld [vmem:[%s178 + $0x2c4] sm:$0xff]
        %v327 = vld [vmem:[%s178 + $0x2cc] sm:$0xf]
        %v328 = vld [vmem:[%s178 + $0x2d0] sm:$0xff]
        %v329 = vld [vmem:[%s178 + $0x2d8] sm:$0xf]
        %v330 = vld [vmem:[%s178 + $0x2dc] sm:$0xff]
        %v331 = vld [vmem:[%s178 + $0x2e4] sm:$0xf]
        %v332 = vld [vmem:[%s178 + $0x2e8] sm:$0xff]
        %v333 = vld [vmem:[%s178 + $0x2f0] sm:$0xf]
        %v334 = vld [vmem:[%s178 + $0x2f4] sm:$0xff]
        %v335 = vld [vmem:[%s178 + $0x2fc] sm:$0xf]
        %v336 = vld [vmem:[#allocation5] sm:$0xf]
        %v337 = vld [vmem:[#allocation5 + $0x4] sm:$0xf]
        %v338 = vld [vmem:[#allocation5 + $0x8] sm:$0xf]
        %v339 = vld [vmem:[#allocation5 + $0xc] sm:$0xf]
        %v340 = vld [vmem:[#allocation5 + $0x10] sm:$0xf]
        %v341 = vld [vmem:[#allocation5 + $0x14] sm:$0xf]
        %v342 = vld [vmem:[#allocation5 + $0x18] sm:$0xf]
        %v343 = vld [vmem:[#allocation5 + $0x1c] sm:$0xf]
        %v344 = vld [vmem:[#allocation5 + $0x20] sm:$0xf]
        %v345 = vld [vmem:[#allocation5 + $0x24] sm:$0xf]
        %v346 = vld [vmem:[#allocation5 + $0x28] sm:$0xf]
        %v347 = vld [vmem:[#allocation5 + $0x2c] sm:$0xf]
        %v348 = vld [vmem:[#allocation5 + $0x30] sm:$0xf]
        %v349 = vld [vmem:[#allocation5 + $0x34] sm:$0xf]
        %v350 = vld [vmem:[#allocation5 + $0x38] sm:$0xf]
        %v351 = vld [vmem:[#allocation5 + $0x3c] sm:$0xf]
        %v352 = vld [vmem:[#allocation5 + $0x40] sm:$0xf]
        %v353 = vld [vmem:[#allocation5 + $0x44] sm:$0xf]
        %v354 = vld [vmem:[#allocation5 + $0x48] sm:$0xf]
        %v355 = vld [vmem:[#allocation5 + $0x4c] sm:$0xf]
        %v356 = vld [vmem:[#allocation5 + $0x50] sm:$0xf]
        %v357 = vld [vmem:[#allocation5 + $0x54] sm:$0xf]
        %v358 = vld [vmem:[#allocation5 + $0x58] sm:$0xf]
        %v359 = vld [vmem:[#allocation5 + $0x5c] sm:$0xf]
        %v360 = vld [vmem:[#allocation5 + $0x60] sm:$0xf]
        %v361 = vld [vmem:[#allocation5 + $0x64] sm:$0xf]
        %v362 = vld [vmem:[#allocation5 + $0x68] sm:$0xf]
        %v363 = vld [vmem:[#allocation5 + $0x6c] sm:$0xf]
        %v364 = vld [vmem:[#allocation5 + $0x70] sm:$0xf]
        %v365 = vld [vmem:[#allocation5 + $0x74] sm:$0xf]
        %v366 = vld [vmem:[#allocation5 + $0x78] sm:$0xf]
        %v367 = vld [vmem:[#allocation5 + $0x7c] sm:$0xf]
        %v368 = vld [vmem:[#allocation5 + $0x80] sm:$0xf]
        %v369 = vld [vmem:[#allocation5 + $0x84] sm:$0xf]
        %v370 = vld [vmem:[#allocation5 + $0x88] sm:$0xf]
        %v371 = vld [vmem:[#allocation5 + $0x8c] sm:$0xf]
        %v372 = vld [vmem:[#allocation5 + $0x90] sm:$0xf]
        %v373 = vld [vmem:[#allocation5 + $0x94] sm:$0xf]
        %v374 = vld [vmem:[#allocation5 + $0x98] sm:$0xf]
        %v375 = vld [vmem:[#allocation5 + $0x9c] sm:$0xf]
        %v376 = vld [vmem:[#allocation5 + $0xa0] sm:$0xf]
        %v377 = vld [vmem:[#allocation5 + $0xa4] sm:$0xf]
        %v378 = vld [vmem:[#allocation5 + $0xa8] sm:$0xf]
        %v379 = vld [vmem:[#allocation5 + $0xac] sm:$0xf]
        %v380 = vld [vmem:[#allocation5 + $0xb0] sm:$0xf]
        %v381 = vld [vmem:[#allocation5 + $0xb4] sm:$0xf]
        %v382 = vld [vmem:[#allocation5 + $0xb8] sm:$0xf]
        %v383 = vld [vmem:[#allocation5 + $0xbc] sm:$0xf]
        %v384 = vld [vmem:[%s2] sm:$0x1]
        %v385 = vunpack.c.l.bf16 %v384
        %v386 = vlaneseq
        %v387 = vshrl.u32 %v386, 7
        %v388 = vsub.s32 0, %v387
        %v389 = vrot.slane %v385, %v388
        %v518 = vunpack.c.l.b16 %v208
        %v519 = vunpack.c.h.b16 %v208
        %v520 = vunpack.c.l.b16 %v209
        %v521 = vunpack.c.l.b16 %v210
        %v522 = vunpack.c.h.b16 %v210
        %v523 = vunpack.c.l.b16 %v211
        %v524 = vunpack.c.l.b16 %v212
        %v525 = vunpack.c.h.b16 %v212
        %v526 = vunpack.c.l.b16 %v213
        %v527 = vunpack.c.l.b16 %v214
        %v528 = vunpack.c.h.b16 %v214
        %v529 = vunpack.c.l.b16 %v215
        %v530 = vunpack.c.l.b16 %v216
        %v531 = vunpack.c.h.b16 %v216
        %v532 = vunpack.c.l.b16 %v217
        %v533 = vunpack.c.l.b16 %v218
        %v534 = vunpack.c.h.b16 %v218
        %v535 = vunpack.c.l.b16 %v219
        %v536 = vunpack.c.l.b16 %v220
        %v537 = vunpack.c.h.b16 %v220
        %v538 = vunpack.c.l.b16 %v221
        %v539 = vunpack.c.l.b16 %v222
        %v540 = vunpack.c.h.b16 %v222
        %v541 = vunpack.c.l.b16 %v223
        %v542 = vunpack.c.l.b16 %v224
        %v543 = vunpack.c.h.b16 %v224
        %v544 = vunpack.c.l.b16 %v225
        %v545 = vunpack.c.l.b16 %v226
        %v546 = vunpack.c.h.b16 %v226
        %v547 = vunpack.c.l.b16 %v227
        %v548 = vunpack.c.l.b16 %v228
        %v549 = vunpack.c.h.b16 %v228
        %v550 = vunpack.c.l.b16 %v229
        %v551 = vunpack.c.l.b16 %v230
        %v552 = vunpack.c.h.b16 %v230
        %v553 = vunpack.c.l.b16 %v231
        %v554 = vunpack.c.l.b16 %v232
        %v555 = vunpack.c.h.b16 %v232
        %v556 = vunpack.c.l.b16 %v233
        %v557 = vunpack.c.l.b16 %v234
        %v558 = vunpack.c.h.b16 %v234
        %v559 = vunpack.c.l.b16 %v235
        %v560 = vunpack.c.l.b16 %v236
        %v561 = vunpack.c.h.b16 %v236
        %v562 = vunpack.c.l.b16 %v237
        %v563 = vunpack.c.l.b16 %v238
        %v564 = vunpack.c.h.b16 %v238
        %v565 = vunpack.c.l.b16 %v239
        %v566 = vunpack.c.l.b16 %v240
        %v567 = vunpack.c.h.b16 %v240
        %v568 = vunpack.c.l.b16 %v241
        %v569 = vunpack.c.l.b16 %v242
        %v570 = vunpack.c.h.b16 %v242
        %v571 = vunpack.c.l.b16 %v243
        %v572 = vunpack.c.l.b16 %v244
        %v573 = vunpack.c.h.b16 %v244
        %v574 = vunpack.c.l.b16 %v245
        %v575 = vunpack.c.l.b16 %v246
        %v576 = vunpack.c.h.b16 %v246
        %v577 = vunpack.c.l.b16 %v247
        %v578 = vunpack.c.l.b16 %v248
        %v579 = vunpack.c.h.b16 %v248
        %v580 = vunpack.c.l.b16 %v249
        %v581 = vunpack.c.l.b16 %v250
        %v582 = vunpack.c.h.b16 %v250
        %v583 = vunpack.c.l.b16 %v251
        %v584 = vunpack.c.l.b16 %v252
        %v585 = vunpack.c.h.b16 %v252
        %v586 = vunpack.c.l.b16 %v253
        %v587 = vunpack.c.l.b16 %v254
        %v588 = vunpack.c.h.b16 %v254
        %v589 = vunpack.c.l.b16 %v255
        %v590 = vunpack.c.l.b16 %v256
        %v591 = vunpack.c.h.b16 %v256
        %v592 = vunpack.c.l.b16 %v257
        %v593 = vunpack.c.l.b16 %v258
        %v594 = vunpack.c.h.b16 %v258
        %v595 = vunpack.c.l.b16 %v259
        %v596 = vunpack.c.l.b16 %v260
        %v597 = vunpack.c.h.b16 %v260
        %v598 = vunpack.c.l.b16 %v261
        %v599 = vunpack.c.l.b16 %v262
        %v600 = vunpack.c.h.b16 %v262
        %v601 = vunpack.c.l.b16 %v263
        %v602 = vunpack.c.l.b16 %v264
        %v603 = vunpack.c.h.b16 %v264
        %v604 = vunpack.c.l.b16 %v265
        %v605 = vunpack.c.l.b16 %v266
        %v606 = vunpack.c.h.b16 %v266
        %v607 = vunpack.c.l.b16 %v267
        %v608 = vunpack.c.l.b16 %v268
        %v609 = vunpack.c.h.b16 %v268
        %v610 = vunpack.c.l.b16 %v269
        %v611 = vunpack.c.l.b16 %v270
        %v612 = vunpack.c.h.b16 %v270
        %v613 = vunpack.c.l.b16 %v271
        %v614 = vunpack.c.l.b16 %v272
        %v615 = vunpack.c.h.b16 %v272
        %v616 = vunpack.c.l.b16 %v273
        %v617 = vunpack.c.l.b16 %v274
        %v618 = vunpack.c.h.b16 %v274
        %v619 = vunpack.c.l.b16 %v275
        %v620 = vunpack.c.l.b16 %v276
        %v621 = vunpack.c.h.b16 %v276
        %v622 = vunpack.c.l.b16 %v277
        %v623 = vunpack.c.l.b16 %v278
        %v624 = vunpack.c.h.b16 %v278
        %v625 = vunpack.c.l.b16 %v279
        %v626 = vunpack.c.l.b16 %v280
        %v627 = vunpack.c.h.b16 %v280
        %v628 = vunpack.c.l.b16 %v281
        %v629 = vunpack.c.l.b16 %v282
        %v630 = vunpack.c.h.b16 %v282
        %v631 = vunpack.c.l.b16 %v283
        %v632 = vunpack.c.l.b16 %v284
        %v633 = vunpack.c.h.b16 %v284
        %v634 = vunpack.c.l.b16 %v285
        %v635 = vunpack.c.l.b16 %v286
        %v636 = vunpack.c.h.b16 %v286
        %v637 = vunpack.c.l.b16 %v287
        %v638 = vunpack.c.l.b16 %v288
        %v639 = vunpack.c.h.b16 %v288
        %v640 = vunpack.c.l.b16 %v289
        %v641 = vunpack.c.l.b16 %v290
        %v642 = vunpack.c.h.b16 %v290
        %v643 = vunpack.c.l.b16 %v291
        %v644 = vunpack.c.l.b16 %v292
        %v645 = vunpack.c.h.b16 %v292
        %v646 = vunpack.c.l.b16 %v293
        %v647 = vunpack.c.l.b16 %v294
        %v648 = vunpack.c.h.b16 %v294
        %v649 = vunpack.c.l.b16 %v295
        %v650 = vunpack.c.l.b16 %v296
        %v651 = vunpack.c.h.b16 %v296
        %v652 = vunpack.c.l.b16 %v297
        %v653 = vunpack.c.l.b16 %v298
        %v654 = vunpack.c.h.b16 %v298
        %v655 = vunpack.c.l.b16 %v299
        %v656 = vunpack.c.l.b16 %v300
        %v657 = vunpack.c.h.b16 %v300
        %v658 = vunpack.c.l.b16 %v301
        %v659 = vunpack.c.l.b16 %v302
        %v660 = vunpack.c.h.b16 %v302
        %v661 = vunpack.c.l.b16 %v303
        %v662 = vunpack.c.l.b16 %v304
        %v663 = vunpack.c.h.b16 %v304
        %v664 = vunpack.c.l.b16 %v305
        %v665 = vunpack.c.l.b16 %v306
        %v666 = vunpack.c.h.b16 %v306
        %v667 = vunpack.c.l.b16 %v307
        %v668 = vunpack.c.l.b16 %v308
        %v669 = vunpack.c.h.b16 %v308
        %v670 = vunpack.c.l.b16 %v309
        %v671 = vunpack.c.l.b16 %v310
        %v672 = vunpack.c.h.b16 %v310
        %v673 = vunpack.c.l.b16 %v311
        %v674 = vunpack.c.l.b16 %v312
        %v675 = vunpack.c.h.b16 %v312
        %v676 = vunpack.c.l.b16 %v313
        %v677 = vunpack.c.l.b16 %v314
        %v678 = vunpack.c.h.b16 %v314
        %v679 = vunpack.c.l.b16 %v315
        %v680 = vunpack.c.l.b16 %v316
        %v681 = vunpack.c.h.b16 %v316
        %v682 = vunpack.c.l.b16 %v317
        %v683 = vunpack.c.l.b16 %v318
        %v684 = vunpack.c.h.b16 %v318
        %v685 = vunpack.c.l.b16 %v319
        %v686 = vunpack.c.l.b16 %v320
        %v687 = vunpack.c.h.b16 %v320
        %v688 = vunpack.c.l.b16 %v321
        %v689 = vunpack.c.l.b16 %v322
        %v690 = vunpack.c.h.b16 %v322
        %v691 = vunpack.c.l.b16 %v323
        %v692 = vunpack.c.l.b16 %v324
        %v693 = vunpack.c.h.b16 %v324
        %v694 = vunpack.c.l.b16 %v325
        %v695 = vunpack.c.l.b16 %v326
        %v696 = vunpack.c.h.b16 %v326
        %v697 = vunpack.c.l.b16 %v327
        %v698 = vunpack.c.l.b16 %v328
        %v699 = vunpack.c.h.b16 %v328
        %v700 = vunpack.c.l.b16 %v329
        %v701 = vunpack.c.l.b16 %v330
        %v702 = vunpack.c.h.b16 %v330
        %v703 = vunpack.c.l.b16 %v331
        %v704 = vunpack.c.l.b16 %v332
        %v705 = vunpack.c.h.b16 %v332
        %v706 = vunpack.c.l.b16 %v333
        %v707 = vunpack.c.l.b16 %v334
        %v708 = vunpack.c.h.b16 %v334
        %v709 = vunpack.c.l.b16 %v335
        %v710 = vpack.c.b16 %v521, %v518
        %v711 = vpack.c.b16 %v522, %v519
        %v712 = vpack.c.b16 %v523, %v520
        %v713 = vpack.c.b16 %v527, %v524
        %v714 = vpack.c.b16 %v528, %v525
        %v715 = vpack.c.b16 %v529, %v526
        %v716 = vpack.c.b16 %v533, %v530
        %v717 = vpack.c.b16 %v534, %v531
        %v718 = vpack.c.b16 %v535, %v532
        %v719 = vpack.c.b16 %v539, %v536
        %v720 = vpack.c.b16 %v540, %v537
        %v721 = vpack.c.b16 %v541, %v538
        %v722 = vpack.c.b16 %v545, %v542
        %v723 = vpack.c.b16 %v546, %v543
        %v724 = vpack.c.b16 %v547, %v544
        %v725 = vpack.c.b16 %v551, %v548
        %v726 = vpack.c.b16 %v552, %v549
        %v727 = vpack.c.b16 %v553, %v550
        %v728 = vpack.c.b16 %v557, %v554
        %v729 = vpack.c.b16 %v558, %v555
        %v730 = vpack.c.b16 %v559, %v556
        %v731 = vpack.c.b16 %v563, %v560
        %v732 = vpack.c.b16 %v564, %v561
        %v733 = vpack.c.b16 %v565, %v562
        %v734 = vpack.c.b16 %v569, %v566
        %v735 = vpack.c.b16 %v570, %v567
        %v736 = vpack.c.b16 %v571, %v568
        %v737 = vpack.c.b16 %v575, %v572
        %v738 = vpack.c.b16 %v576, %v573
        %v739 = vpack.c.b16 %v577, %v574
        %v740 = vpack.c.b16 %v581, %v578
        %v741 = vpack.c.b16 %v582, %v579
        %v742 = vpack.c.b16 %v583, %v580
        %v743 = vpack.c.b16 %v587, %v584
        %v744 = vpack.c.b16 %v588, %v585
        %v745 = vpack.c.b16 %v589, %v586
        %v746 = vpack.c.b16 %v593, %v590
        %v747 = vpack.c.b16 %v594, %v591
        %v748 = vpack.c.b16 %v595, %v592
        %v749 = vpack.c.b16 %v599, %v596
        %v750 = vpack.c.b16 %v600, %v597
        %v751 = vpack.c.b16 %v601, %v598
        %v752 = vpack.c.b16 %v605, %v602
        %v753 = vpack.c.b16 %v606, %v603
        %v754 = vpack.c.b16 %v607, %v604
        %v755 = vpack.c.b16 %v611, %v608
        %v756 = vpack.c.b16 %v612, %v609
        %v757 = vpack.c.b16 %v613, %v610
        %v758 = vpack.c.b16 %v617, %v614
        %v759 = vpack.c.b16 %v618, %v615
        %v760 = vpack.c.b16 %v619, %v616
        %v761 = vpack.c.b16 %v623, %v620
        %v762 = vpack.c.b16 %v624, %v621
        %v763 = vpack.c.b16 %v625, %v622
        %v764 = vpack.c.b16 %v629, %v626
        %v765 = vpack.c.b16 %v630, %v627
        %v766 = vpack.c.b16 %v631, %v628
        %v767 = vpack.c.b16 %v635, %v632
        %v768 = vpack.c.b16 %v636, %v633
        %v769 = vpack.c.b16 %v637, %v634
        %v770 = vpack.c.b16 %v641, %v638
        %v771 = vpack.c.b16 %v642, %v639
        %v772 = vpack.c.b16 %v643, %v640
        %v773 = vpack.c.b16 %v647, %v644
        %v774 = vpack.c.b16 %v648, %v645
        %v775 = vpack.c.b16 %v649, %v646
        %v776 = vpack.c.b16 %v653, %v650
        %v777 = vpack.c.b16 %v654, %v651
        %v778 = vpack.c.b16 %v655, %v652
        %v779 = vpack.c.b16 %v659, %v656
        %v780 = vpack.c.b16 %v660, %v657
        %v781 = vpack.c.b16 %v661, %v658
        %v782 = vpack.c.b16 %v665, %v662
        %v783 = vpack.c.b16 %v666, %v663
        %v784 = vpack.c.b16 %v667, %v664
        %v785 = vpack.c.b16 %v671, %v668
        %v786 = vpack.c.b16 %v672, %v669
        %v787 = vpack.c.b16 %v673, %v670
        %v788 = vpack.c.b16 %v677, %v674
        %v789 = vpack.c.b16 %v678, %v675
        %v790 = vpack.c.b16 %v679, %v676
        %v791 = vpack.c.b16 %v683, %v680
        %v792 = vpack.c.b16 %v684, %v681
        %v793 = vpack.c.b16 %v685, %v682
        %v794 = vpack.c.b16 %v689, %v686
        %v795 = vpack.c.b16 %v690, %v687
        %v796 = vpack.c.b16 %v691, %v688
        %v797 = vpack.c.b16 %v695, %v692
        %v798 = vpack.c.b16 %v696, %v693
        %v799 = vpack.c.b16 %v697, %v694
        %v800 = vpack.c.b16 %v701, %v698
        %v801 = vpack.c.b16 %v702, %v699
        %v802 = vpack.c.b16 %v703, %v700
        %v803 = vpack.c.b16 %v707, %v704
        %v804 = vpack.c.b16 %v708, %v705
        %v805 = vpack.c.b16 %v709, %v706
        %v950 = vunpack.c.l.b16 %v336
        %v951 = vunpack.c.l.b16 %v337
        %v952 = vunpack.c.l.b16 %v338
        %v953 = vunpack.c.l.b16 %v339
        %v954 = vunpack.c.l.b16 %v340
        %v955 = vunpack.c.l.b16 %v341
        %v956 = vunpack.c.l.b16 %v342
        %v957 = vunpack.c.l.b16 %v343
        %v958 = vunpack.c.l.b16 %v344
        %v959 = vunpack.c.l.b16 %v345
        %v960 = vunpack.c.l.b16 %v346
        %v961 = vunpack.c.l.b16 %v347
        %v962 = vunpack.c.l.b16 %v348
        %v963 = vunpack.c.l.b16 %v349
        %v964 = vunpack.c.l.b16 %v350
        %v965 = vunpack.c.l.b16 %v351
        %v966 = vunpack.c.l.b16 %v352
        %v967 = vunpack.c.l.b16 %v353
        %v968 = vunpack.c.l.b16 %v354
        %v969 = vunpack.c.l.b16 %v355
        %v970 = vunpack.c.l.b16 %v356
        %v971 = vunpack.c.l.b16 %v357
        %v972 = vunpack.c.l.b16 %v358
        %v973 = vunpack.c.l.b16 %v359
        %v974 = vunpack.c.l.b16 %v360
        %v975 = vunpack.c.l.b16 %v361
        %v976 = vunpack.c.l.b16 %v362
        %v977 = vunpack.c.l.b16 %v363
        %v978 = vunpack.c.l.b16 %v364
        %v979 = vunpack.c.l.b16 %v365
        %v980 = vunpack.c.l.b16 %v366
        %v981 = vunpack.c.l.b16 %v367
        %v982 = vunpack.c.l.b16 %v368
        %v983 = vunpack.c.l.b16 %v369
        %v984 = vunpack.c.l.b16 %v370
        %v985 = vunpack.c.l.b16 %v371
        %v986 = vunpack.c.l.b16 %v372
        %v987 = vunpack.c.l.b16 %v373
        %v988 = vunpack.c.l.b16 %v374
        %v989 = vunpack.c.l.b16 %v375
        %v990 = vunpack.c.l.b16 %v376
        %v991 = vunpack.c.l.b16 %v377
        %v992 = vunpack.c.l.b16 %v378
        %v993 = vunpack.c.l.b16 %v379
        %v994 = vunpack.c.l.b16 %v380
        %v995 = vunpack.c.l.b16 %v381
        %v996 = vunpack.c.l.b16 %v382
        %v997 = vunpack.c.l.b16 %v383
        %v998 = vpack.c.b16 %v951, %v950
        %v999 = vpack.c.b16 %v953, %v952
        %v1000 = vpack.c.b16 %v955, %v954
        %v1001 = vpack.c.b16 %v957, %v956
        %v1002 = vpack.c.b16 %v959, %v958
        %v1003 = vpack.c.b16 %v961, %v960
        %v1004 = vpack.c.b16 %v963, %v962
        %v1005 = vpack.c.b16 %v965, %v964
        %v1006 = vpack.c.b16 %v967, %v966
        %v1007 = vpack.c.b16 %v969, %v968
        %v1008 = vpack.c.b16 %v971, %v970
        %v1009 = vpack.c.b16 %v973, %v972
        %v1010 = vpack.c.b16 %v975, %v974
        %v1011 = vpack.c.b16 %v977, %v976
        %v1012 = vpack.c.b16 %v979, %v978
        %v1013 = vpack.c.b16 %v981, %v980
        %v1014 = vpack.c.b16 %v983, %v982
        %v1015 = vpack.c.b16 %v985, %v984
        %v1016 = vpack.c.b16 %v987, %v986
        %v1017 = vpack.c.b16 %v989, %v988
        %v1018 = vpack.c.b16 %v991, %v990
        %v1019 = vpack.c.b16 %v993, %v992
        %v1020 = vpack.c.b16 %v995, %v994
        %v1021 = vpack.c.b16 %v997, %v996
        %1046 = vmatprep.subr.bf16.mxu0 0
        %1047 = vmatpush1.bf16.msra.mxu0 %v998
        %1048 = vmatprep.subr.bf16.mxu0 0
        %1049 = vmatpush1.bf16.msra.mxu0 %v999
        %1050 = vmatprep.subr.bf16.mxu0 0
        %1051 = vmatpush1.bf16.msra.mxu0 %v1000
        %1052 = vmatprep.subr.bf16.mxu0 0
        %1053 = vmatpush1.bf16.msra.mxu0 %v1001
        %1054 = vmatprep.subr.bf16.mxu0 0
        %1055 = vmatpush1.bf16.msra.mxu0 %v1002
        %1056 = vmatprep.subr.bf16.mxu0 0
        %1057 = vmatpush1.bf16.msra.mxu0 %v1003
        %1058 = vmatprep.subr.bf16.mxu0 0
        %1059 = vmatpush1.bf16.msra.mxu0 %v1004
        %1060 = vmatprep.subr.bf16.mxu0 0
        %1061 = vmatpush1.bf16.msra.mxu0 %v1005
        %1062 = vmatprep.subr.bf16.mxu0 0
        %1063 = vmatpush1.bf16.msra.mxu0 %v1006
        %1064 = vmatprep.subr.bf16.mxu0 0
        %1065 = vmatpush1.bf16.msra.mxu0 %v1007
        %1066 = vmatprep.subr.bf16.mxu0 0
        %1067 = vmatpush1.bf16.msra.mxu0 %v1008
        %1068 = vmatprep.subr.bf16.mxu0 0
        %1069 = vmatpush1.bf16.msra.mxu0 %v1009
        %1070 = vmatprep.subr.bf16.mxu0 0
        %1071 = vmatpush1.bf16.msra.mxu0 %v1010
        %1072 = vmatprep.subr.bf16.mxu0 0
        %1073 = vmatpush1.bf16.msra.mxu0 %v1011
        %1074 = vmatprep.subr.bf16.mxu0 0
        %1075 = vmatpush1.bf16.msra.mxu0 %v1012
        %1076 = vmatprep.subr.bf16.mxu0 0
        %1077 = vmatpush1.bf16.msra.mxu0 %v1013
        %1078 = vmatprep.mubr.bf16.mxu0 %v711
        %1079 = vmatmul.mubr.bf16.gmra.mrb[0].mxu0 %v710
        %v1080 = vpop.f32.mrb[0].mxu0
        %v1081 = vadd.f32 %v389, %v1080
        %v1082 = vpop.f32.mrb[0].mxu0
        %v1083 = vpop.f32.mrb[0].mxu0
        %v1084 = vadd.f32 %v389, %v1083
        %v1085 = vpop.f32.mrb[0].mxu0
        %1086 = vmatprep.mubr.bf16.mxu0 %v714
        %1087 = vmatmul.mubr.bf16.gmra.mrb[0].mxu0 %v713
        %v1088 = vpop.f32.mrb[0].mxu0
        %v1089 = vadd.f32 %v389, %v1088
        %v1090 = vpop.f32.mrb[0].mxu0
        %v1091 = vpop.f32.mrb[0].mxu0
        %v1092 = vadd.f32 %v389, %v1091
        %v1093 = vpop.f32.mrb[0].mxu0
        %1094 = vmatprep.mubr.bf16.mxu0 %v717
        %1095 = vmatmul.mubr.bf16.gmra.mrb[0].mxu0 %v716
        %v1096 = vpop.f32.mrb[0].mxu0
        %v1097 = vadd.f32 %v389, %v1096
        %v1098 = vpop.f32.mrb[0].mxu0
        %v1099 = vpop.f32.mrb[0].mxu0
        %v1100 = vadd.f32 %v389, %v1099
        %v1101 = vpop.f32.mrb[0].mxu0
        %1102 = vmatprep.mubr.bf16.mxu0 %v720
        %1103 = vmatmul.mubr.bf16.gmra.mrb[0].mxu0 %v719
        %v1104 = vpop.f32.mrb[0].mxu0
        %v1105 = vadd.f32 %v389, %v1104
        %v1106 = vpop.f32.mrb[0].mxu0
        %v1107 = vpop.f32.mrb[0].mxu0
        %v1108 = vadd.f32 %v389, %v1107
        %v1109 = vpop.f32.mrb[0].mxu0
        %1110 = vmatprep.mubr.bf16.mxu0 %v723
        %1111 = vmatmul.mubr.bf16.gmra.mrb[0].mxu0 %v722
        %v1112 = vpop.f32.mrb[0].mxu0
        %v1113 = vadd.f32 %v389, %v1112
        %v1114 = vpop.f32.mrb[0].mxu0
        %v1115 = vpop.f32.mrb[0].mxu0
        %v1116 = vadd.f32 %v389, %v1115
        %v1117 = vpop.f32.mrb[0].mxu0
        %1118 = vmatprep.mubr.bf16.mxu0 %v726
        %1119 = vmatmul.mubr.bf16.gmra.mrb[0].mxu0 %v725
        %v1120 = vpop.f32.mrb[0].mxu0
        %v1121 = vadd.f32 %v389, %v1120
        %v1122 = vpop.f32.mrb[0].mxu0
        %v1123 = vpop.f32.mrb[0].mxu0
        %v1124 = vadd.f32 %v389, %v1123
        %v1125 = vpop.f32.mrb[0].mxu0
        %1126 = vmatprep.mubr.bf16.mxu0 %v729
        %1127 = vmatmul.mubr.bf16.gmra.mrb[0].mxu0 %v728
        %v1128 = vpop.f32.mrb[0].mxu0
        %v1129 = vadd.f32 %v389, %v1128
        %v1130 = vpop.f32.mrb[0].mxu0
        %v1131 = vpop.f32.mrb[0].mxu0
        %v1132 = vadd.f32 %v389, %v1131
        %v1133 = vpop.f32.mrb[0].mxu0
        %1134 = vmatprep.mubr.bf16.mxu0 %v732
        %1135 = vmatmul.mubr.bf16.gmra.mrb[0].mxu0 %v731
        %v1136 = vpop.f32.mrb[0].mxu0
        %v1137 = vadd.f32 %v389, %v1136
        %v1138 = vpop.f32.mrb[0].mxu0
        %v1139 = vpop.f32.mrb[0].mxu0
        %v1140 = vadd.f32 %v389, %v1139
        %v1141 = vpop.f32.mrb[0].mxu0
        %1142 = vmatprep.mubr.bf16.mxu0 %v735
        %1143 = vmatmul.mubr.bf16.gmra.mrb[0].mxu0 %v734
        %v1144 = vpop.f32.mrb[0].mxu0
        %v1145 = vadd.f32 %v389, %v1144
        %v1146 = vpop.f32.mrb[0].mxu0
        %v1147 = vpop.f32.mrb[0].mxu0
        %v1148 = vadd.f32 %v389, %v1147
        %v1149 = vpop.f32.mrb[0].mxu0
        %1150 = vmatprep.mubr.bf16.mxu0 %v738
        %1151 = vmatmul.mubr.bf16.gmra.mrb[0].mxu0 %v737
        %v1152 = vpop.f32.mrb[0].mxu0
        %v1153 = vadd.f32 %v389, %v1152
        %v1154 = vpop.f32.mrb[0].mxu0
        %v1155 = vpop.f32.mrb[0].mxu0
        %v1156 = vadd.f32 %v389, %v1155
        %v1157 = vpop.f32.mrb[0].mxu0
        %1158 = vmatprep.mubr.bf16.mxu0 %v741
        %1159 = vmatmul.mubr.bf16.gmra.mrb[0].mxu0 %v740
        %v1160 = vpop.f32.mrb[0].mxu0
        %v1161 = vadd.f32 %v389, %v1160
        %v1162 = vpop.f32.mrb[0].mxu0
        %v1163 = vpop.f32.mrb[0].mxu0
        %v1164 = vadd.f32 %v389, %v1163
        %v1165 = vpop.f32.mrb[0].mxu0
        %1166 = vmatprep.mubr.bf16.mxu0 %v744
        %1167 = vmatmul.mubr.bf16.gmra.mrb[0].mxu0 %v743
        %v1168 = vpop.f32.mrb[0].mxu0
        %v1169 = vadd.f32 %v389, %v1168
        %v1170 = vpop.f32.mrb[0].mxu0
        %v1171 = vpop.f32.mrb[0].mxu0
        %v1172 = vadd.f32 %v389, %v1171
        %v1173 = vpop.f32.mrb[0].mxu0
        %1174 = vmatprep.mubr.bf16.mxu0 %v747
        %1175 = vmatmul.mubr.bf16.gmra.mrb[0].mxu0 %v746
        %v1176 = vpop.f32.mrb[0].mxu0
        %v1177 = vadd.f32 %v389, %v1176
        %v1178 = vpop.f32.mrb[0].mxu0
        %v1179 = vpop.f32.mrb[0].mxu0
        %v1180 = vadd.f32 %v389, %v1179
        %v1181 = vpop.f32.mrb[0].mxu0
        %1182 = vmatprep.mubr.bf16.mxu0 %v750
        %1183 = vmatmul.mubr.bf16.gmra.mrb[0].mxu0 %v749
        %v1184 = vpop.f32.mrb[0].mxu0
        %v1185 = vadd.f32 %v389, %v1184
        %v1186 = vpop.f32.mrb[0].mxu0
        %v1187 = vpop.f32.mrb[0].mxu0
        %v1188 = vadd.f32 %v389, %v1187
        %v1189 = vpop.f32.mrb[0].mxu0
        %1190 = vmatprep.mubr.bf16.mxu0 %v753
        %1191 = vmatmul.mubr.bf16.gmra.mrb[0].mxu0 %v752
        %v1192 = vpop.f32.mrb[0].mxu0
        %v1193 = vadd.f32 %v389, %v1192
        %v1194 = vpop.f32.mrb[0].mxu0
        %v1195 = vpop.f32.mrb[0].mxu0
        %v1196 = vadd.f32 %v389, %v1195
        %v1197 = vpop.f32.mrb[0].mxu0
        %1198 = vmatprep.mubr.bf16.mxu0 %v756
        %1199 = vmatmul.mubr.bf16.gmra.mrb[0].mxu0 %v755
        %v1200 = vpop.f32.mrb[0].mxu0
        %v1201 = vadd.f32 %v389, %v1200
        %v1202 = vpop.f32.mrb[0].mxu0
        %v1203 = vpop.f32.mrb[0].mxu0
        %v1204 = vadd.f32 %v389, %v1203
        %v1205 = vpop.f32.mrb[0].mxu0
        %1206 = vmatprep.mubr.bf16.mxu0 %v759
        %1207 = vmatmul.mubr.bf16.gmra.mrb[0].mxu0 %v758
        %v1208 = vpop.f32.mrb[0].mxu0
        %v1209 = vadd.f32 %v389, %v1208
        %v1210 = vpop.f32.mrb[0].mxu0
        %v1211 = vpop.f32.mrb[0].mxu0
        %v1212 = vadd.f32 %v389, %v1211
        %v1213 = vpop.f32.mrb[0].mxu0
        %1214 = vmatprep.mubr.bf16.mxu0 %v762
        %1215 = vmatmul.mubr.bf16.gmra.mrb[0].mxu0 %v761
        %v1216 = vpop.f32.mrb[0].mxu0
        %v1217 = vadd.f32 %v389, %v1216
        %v1218 = vpop.f32.mrb[0].mxu0
        %v1219 = vpop.f32.mrb[0].mxu0
        %v1220 = vadd.f32 %v389, %v1219
        %v1221 = vpop.f32.mrb[0].mxu0
        %1222 = vmatprep.mubr.bf16.mxu0 %v765
        %1223 = vmatmul.mubr.bf16.gmra.mrb[0].mxu0 %v764
        %v1224 = vpop.f32.mrb[0].mxu0
        %v1225 = vadd.f32 %v389, %v1224
        %v1226 = vpop.f32.mrb[0].mxu0
        %v1227 = vpop.f32.mrb[0].mxu0
        %v1228 = vadd.f32 %v389, %v1227
        %v1229 = vpop.f32.mrb[0].mxu0
        %1230 = vmatprep.mubr.bf16.mxu0 %v768
        %1231 = vmatmul.mubr.bf16.gmra.mrb[0].mxu0 %v767
        %v1232 = vpop.f32.mrb[0].mxu0
        %v1233 = vadd.f32 %v389, %v1232
        %v1234 = vpop.f32.mrb[0].mxu0
        %v1235 = vpop.f32.mrb[0].mxu0
        %v1236 = vadd.f32 %v389, %v1235
        %v1237 = vpop.f32.mrb[0].mxu0
        %1238 = vmatprep.mubr.bf16.mxu0 %v771
        %1239 = vmatmul.mubr.bf16.gmra.mrb[0].mxu0 %v770
        %v1240 = vpop.f32.mrb[0].mxu0
        %v1241 = vadd.f32 %v389, %v1240
        %v1242 = vpop.f32.mrb[0].mxu0
        %v1243 = vpop.f32.mrb[0].mxu0
        %v1244 = vadd.f32 %v389, %v1243
        %v1245 = vpop.f32.mrb[0].mxu0
        %1246 = vmatprep.mubr.bf16.mxu0 %v774
        %1247 = vmatmul.mubr.bf16.gmra.mrb[0].mxu0 %v773
        %v1248 = vpop.f32.mrb[0].mxu0
        %v1249 = vadd.f32 %v389, %v1248
        %v1250 = vpop.f32.mrb[0].mxu0
        %v1251 = vpop.f32.mrb[0].mxu0
        %v1252 = vadd.f32 %v389, %v1251
        %v1253 = vpop.f32.mrb[0].mxu0
        %1254 = vmatprep.mubr.bf16.mxu0 %v777
        %1255 = vmatmul.mubr.bf16.gmra.mrb[0].mxu0 %v776
        %v1256 = vpop.f32.mrb[0].mxu0
        %v1257 = vadd.f32 %v389, %v1256
        %v1258 = vpop.f32.mrb[0].mxu0
        %v1259 = vpop.f32.mrb[0].mxu0
        %v1260 = vadd.f32 %v389, %v1259
        %v1261 = vpop.f32.mrb[0].mxu0
        %1262 = vmatprep.mubr.bf16.mxu0 %v780
        %1263 = vmatmul.mubr.bf16.gmra.mrb[0].mxu0 %v779
        %v1264 = vpop.f32.mrb[0].mxu0
        %v1265 = vadd.f32 %v389, %v1264
        %v1266 = vpop.f32.mrb[0].mxu0
        %v1267 = vpop.f32.mrb[0].mxu0
        %v1268 = vadd.f32 %v389, %v1267
        %v1269 = vpop.f32.mrb[0].mxu0
        %1270 = vmatprep.mubr.bf16.mxu0 %v783
        %1271 = vmatmul.mubr.bf16.gmra.mrb[0].mxu0 %v782
        %v1272 = vpop.f32.mrb[0].mxu0
        %v1273 = vadd.f32 %v389, %v1272
        %v1274 = vpop.f32.mrb[0].mxu0
        %v1275 = vpop.f32.mrb[0].mxu0
        %v1276 = vadd.f32 %v389, %v1275
        %v1277 = vpop.f32.mrb[0].mxu0
        %1278 = vmatprep.mubr.bf16.mxu0 %v786
        %1279 = vmatmul.mubr.bf16.gmra.mrb[0].mxu0 %v785
        %v1280 = vpop.f32.mrb[0].mxu0
        %v1281 = vadd.f32 %v389, %v1280
        %v1282 = vpop.f32.mrb[0].mxu0
        %v1283 = vpop.f32.mrb[0].mxu0
        %v1284 = vadd.f32 %v389, %v1283
        %v1285 = vpop.f32.mrb[0].mxu0
        %1286 = vmatprep.mubr.bf16.mxu0 %v789
        %1287 = vmatmul.mubr.bf16.gmra.mrb[0].mxu0 %v788
        %v1288 = vpop.f32.mrb[0].mxu0
        %v1289 = vadd.f32 %v389, %v1288
        %v1290 = vpop.f32.mrb[0].mxu0
        %v1291 = vpop.f32.mrb[0].mxu0
        %v1292 = vadd.f32 %v389, %v1291
        %v1293 = vpop.f32.mrb[0].mxu0
        %1294 = vmatprep.mubr.bf16.mxu0 %v792
        %1295 = vmatmul.mubr.bf16.gmra.mrb[0].mxu0 %v791
        %v1296 = vpop.f32.mrb[0].mxu0
        %v1297 = vadd.f32 %v389, %v1296
        %v1298 = vpop.f32.mrb[0].mxu0
        %v1299 = vpop.f32.mrb[0].mxu0
        %v1300 = vadd.f32 %v389, %v1299
        %v1301 = vpop.f32.mrb[0].mxu0
        %1302 = vmatprep.mubr.bf16.mxu0 %v795
        %1303 = vmatmul.mubr.bf16.gmra.mrb[0].mxu0 %v794
        %v1304 = vpop.f32.mrb[0].mxu0
        %v1305 = vadd.f32 %v389, %v1304
        %v1306 = vpop.f32.mrb[0].mxu0
        %v1307 = vpop.f32.mrb[0].mxu0
        %v1308 = vadd.f32 %v389, %v1307
        %v1309 = vpop.f32.mrb[0].mxu0
        %1310 = vmatprep.mubr.bf16.mxu0 %v798
        %1311 = vmatmul.mubr.bf16.gmra.mrb[0].mxu0 %v797
        %v1312 = vpop.f32.mrb[0].mxu0
        %v1313 = vadd.f32 %v389, %v1312
        %v1314 = vpop.f32.mrb[0].mxu0
        %v1315 = vpop.f32.mrb[0].mxu0
        %v1316 = vadd.f32 %v389, %v1315
        %v1317 = vpop.f32.mrb[0].mxu0
        %1318 = vmatprep.mubr.bf16.mxu0 %v801
        %1319 = vmatmul.mubr.bf16.gmra.mrb[0].mxu0 %v800
        %v1320 = vpop.f32.mrb[0].mxu0
        %v1321 = vadd.f32 %v389, %v1320
        %v1322 = vpop.f32.mrb[0].mxu0
        %v1323 = vpop.f32.mrb[0].mxu0
        %v1324 = vadd.f32 %v389, %v1323
        %v1325 = vpop.f32.mrb[0].mxu0
        %1326 = vmatprep.mubr.bf16.mxu0 %v804
        %1327 = vmatmul.mubr.bf16.gmra.mrb[0].mxu0 %v803
        %v1328 = vpop.f32.mrb[0].mxu0
        %v1329 = vadd.f32 %v389, %v1328
        %v1330 = vpop.f32.mrb[0].mxu0
        %v1331 = vpop.f32.mrb[0].mxu0
        %v1332 = vadd.f32 %v389, %v1331
        %v1333 = vpop.f32.mrb[0].mxu0
        %1334 = vdwg.mxu0
        %1335 = vmatprep.subr.bf16.mxu0 0
        %1336 = vmatpush1.bf16.msra.mxu0 %v1014
        %1337 = vmatprep.subr.bf16.mxu0 0
        %1338 = vmatpush1.bf16.msra.mxu0 %v1015
        %1339 = vmatprep.subr.bf16.mxu0 0
        %1340 = vmatpush1.bf16.msra.mxu0 %v1016
        %1341 = vmatprep.subr.bf16.mxu0 0
        %1342 = vmatpush1.bf16.msra.mxu0 %v1017
        %1343 = vmatprep.subr.bf16.mxu0 0
        %1344 = vmatpush1.bf16.msra.mxu0 %v1018
        %1345 = vmatprep.subr.bf16.mxu0 0
        %1346 = vmatpush1.bf16.msra.mxu0 %v1019
        %1347 = vmatprep.subr.bf16.mxu0 0
        %1348 = vmatpush1.bf16.msra.mxu0 %v1020
        %1349 = vmatprep.subr.bf16.mxu0 0
        %1350 = vmatpush1.bf16.msra.mxu0 %v1021
        %1351 = vmatprep.subr.bf16.mxu0 0
        %1352 = vmatpush1.bf16.msra.mxu0 0
        %1353 = vmatprep.subr.bf16.mxu0 0
        %1354 = vmatpush1.bf16.msra.mxu0 0
        %1355 = vmatprep.subr.bf16.mxu0 0
        %1356 = vmatpush1.bf16.msra.mxu0 0
        %1357 = vmatprep.subr.bf16.mxu0 0
        %1358 = vmatpush1.bf16.msra.mxu0 0
        %1359 = vmatprep.subr.bf16.mxu0 0
        %1360 = vmatpush1.bf16.msra.mxu0 0
        %1361 = vmatprep.subr.bf16.mxu0 0
        %1362 = vmatpush1.bf16.msra.mxu0 0
        %1363 = vmatprep.subr.bf16.mxu0 0
        %1364 = vmatpush1.bf16.msra.mxu0 0
        %1365 = vmatprep.subr.bf16.mxu0 0
        %1366 = vmatpush1.bf16.msra.mxu0 0
        %1367 = vmatprep.mubr.bf16.mxu0 0
        %1368 = vmatmul.mubr.bf16.gmra.mrb[0].mxu0 %v712
        %v1369 = vpop.f32.mrb[0].mxu0
        %v1370 = vadd.f32 %v1081, %v1369
        %v1371 = vpop.f32.mrb[0].mxu0
        %v1372 = vpop.f32.mrb[0].mxu0
        %v1373 = vadd.f32 %v1084, %v1372
        %v1374 = vpop.f32.mrb[0].mxu0
        %1375 = vmatprep.mubr.bf16.mxu0 0
        %1376 = vmatmul.mubr.bf16.gmra.mrb[0].mxu0 %v715
        %v1377 = vpop.f32.mrb[0].mxu0
        %v1378 = vadd.f32 %v1089, %v1377
        %v1379 = vpop.f32.mrb[0].mxu0
        %v1380 = vpop.f32.mrb[0].mxu0
        %v1381 = vadd.f32 %v1092, %v1380
        %v1382 = vpop.f32.mrb[0].mxu0
        %1383 = vmatprep.mubr.bf16.mxu0 0
        %1384 = vmatmul.mubr.bf16.gmra.mrb[0].mxu0 %v718
        %v1385 = vpop.f32.mrb[0].mxu0
        %v1386 = vadd.f32 %v1097, %v1385
        %v1387 = vpop.f32.mrb[0].mxu0
        %v1388 = vpop.f32.mrb[0].mxu0
        %v1389 = vadd.f32 %v1100, %v1388
        %v1390 = vpop.f32.mrb[0].mxu0
        %1391 = vmatprep.mubr.bf16.mxu0 0
        %1392 = vmatmul.mubr.bf16.gmra.mrb[0].mxu0 %v721
        %v1393 = vpop.f32.mrb[0].mxu0
        %v1394 = vadd.f32 %v1105, %v1393
        %v1395 = vpop.f32.mrb[0].mxu0
        %v1396 = vpop.f32.mrb[0].mxu0
        %v1397 = vadd.f32 %v1108, %v1396
        %v1398 = vpop.f32.mrb[0].mxu0
        %1399 = vmatprep.mubr.bf16.mxu0 0
        %1400 = vmatmul.mubr.bf16.gmra.mrb[0].mxu0 %v724
        %v1401 = vpop.f32.mrb[0].mxu0
        %v1402 = vadd.f32 %v1113, %v1401
        %v1403 = vpop.f32.mrb[0].mxu0
        %v1404 = vpop.f32.mrb[0].mxu0
        %v1405 = vadd.f32 %v1116, %v1404
        %v1406 = vpop.f32.mrb[0].mxu0
        %1407 = vmatprep.mubr.bf16.mxu0 0
        %1408 = vmatmul.mubr.bf16.gmra.mrb[0].mxu0 %v727
        %v1409 = vpop.f32.mrb[0].mxu0
        %v1410 = vadd.f32 %v1121, %v1409
        %v1411 = vpop.f32.mrb[0].mxu0
        %v1412 = vpop.f32.mrb[0].mxu0
        %v1413 = vadd.f32 %v1124, %v1412
        %v1414 = vpop.f32.mrb[0].mxu0
        %1415 = vmatprep.mubr.bf16.mxu0 0
        %1416 = vmatmul.mubr.bf16.gmra.mrb[0].mxu0 %v730
        %v1417 = vpop.f32.mrb[0].mxu0
        %v1418 = vadd.f32 %v1129, %v1417
        %v1419 = vpop.f32.mrb[0].mxu0
        %v1420 = vpop.f32.mrb[0].mxu0
        %v1421 = vadd.f32 %v1132, %v1420
        %v1422 = vpop.f32.mrb[0].mxu0
        %1423 = vmatprep.mubr.bf16.mxu0 0
        %1424 = vmatmul.mubr.bf16.gmra.mrb[0].mxu0 %v733
        %v1425 = vpop.f32.mrb[0].mxu0
        %v1426 = vadd.f32 %v1137, %v1425
        %v1427 = vpop.f32.mrb[0].mxu0
        %v1428 = vpop.f32.mrb[0].mxu0
        %v1429 = vadd.f32 %v1140, %v1428
        %v1430 = vpop.f32.mrb[0].mxu0
        %1431 = vmatprep.mubr.bf16.mxu0 0
        %1432 = vmatmul.mubr.bf16.gmra.mrb[0].mxu0 %v736
        %v1433 = vpop.f32.mrb[0].mxu0
        %v1434 = vadd.f32 %v1145, %v1433
        %v1435 = vpop.f32.mrb[0].mxu0
        %v1436 = vpop.f32.mrb[0].mxu0
        %v1437 = vadd.f32 %v1148, %v1436
        %v1438 = vpop.f32.mrb[0].mxu0
        %1439 = vmatprep.mubr.bf16.mxu0 0
        %1440 = vmatmul.mubr.bf16.gmra.mrb[0].mxu0 %v739
        %v1441 = vpop.f32.mrb[0].mxu0
        %v1442 = vadd.f32 %v1153, %v1441
        %v1443 = vpop.f32.mrb[0].mxu0
        %v1444 = vpop.f32.mrb[0].mxu0
        %v1445 = vadd.f32 %v1156, %v1444
        %v1446 = vpop.f32.mrb[0].mxu0
        %1447 = vmatprep.mubr.bf16.mxu0 0
        %1448 = vmatmul.mubr.bf16.gmra.mrb[0].mxu0 %v742
        %v1449 = vpop.f32.mrb[0].mxu0
        %v1450 = vadd.f32 %v1161, %v1449
        %v1451 = vpop.f32.mrb[0].mxu0
        %v1452 = vpop.f32.mrb[0].mxu0
        %v1453 = vadd.f32 %v1164, %v1452
        %v1454 = vpop.f32.mrb[0].mxu0
        %1455 = vmatprep.mubr.bf16.mxu0 0
        %1456 = vmatmul.mubr.bf16.gmra.mrb[0].mxu0 %v745
        %v1457 = vpop.f32.mrb[0].mxu0
        %v1458 = vadd.f32 %v1169, %v1457
        %v1459 = vpop.f32.mrb[0].mxu0
        %v1460 = vpop.f32.mrb[0].mxu0
        %v1461 = vadd.f32 %v1172, %v1460
        %v1462 = vpop.f32.mrb[0].mxu0
        %1463 = vmatprep.mubr.bf16.mxu0 0
        %1464 = vmatmul.mubr.bf16.gmra.mrb[0].mxu0 %v748
        %v1465 = vpop.f32.mrb[0].mxu0
        %v1466 = vadd.f32 %v1177, %v1465
        %v1467 = vpop.f32.mrb[0].mxu0
        %v1468 = vpop.f32.mrb[0].mxu0
        %v1469 = vadd.f32 %v1180, %v1468
        %v1470 = vpop.f32.mrb[0].mxu0
        %1471 = vmatprep.mubr.bf16.mxu0 0
        %1472 = vmatmul.mubr.bf16.gmra.mrb[0].mxu0 %v751
        %v1473 = vpop.f32.mrb[0].mxu0
        %v1474 = vadd.f32 %v1185, %v1473
        %v1475 = vpop.f32.mrb[0].mxu0
        %v1476 = vpop.f32.mrb[0].mxu0
        %v1477 = vadd.f32 %v1188, %v1476
        %v1478 = vpop.f32.mrb[0].mxu0
        %1479 = vmatprep.mubr.bf16.mxu0 0
        %1480 = vmatmul.mubr.bf16.gmra.mrb[0].mxu0 %v754
        %v1481 = vpop.f32.mrb[0].mxu0
        %v1482 = vadd.f32 %v1193, %v1481
        %v1483 = vpop.f32.mrb[0].mxu0
        %v1484 = vpop.f32.mrb[0].mxu0
        %v1485 = vadd.f32 %v1196, %v1484
        %v1486 = vpop.f32.mrb[0].mxu0
        %1487 = vmatprep.mubr.bf16.mxu0 0
        %1488 = vmatmul.mubr.bf16.gmra.mrb[0].mxu0 %v757
        %v1489 = vpop.f32.mrb[0].mxu0
        %v1490 = vadd.f32 %v1201, %v1489
        %v1491 = vpop.f32.mrb[0].mxu0
        %v1492 = vpop.f32.mrb[0].mxu0
        %v1493 = vadd.f32 %v1204, %v1492
        %v1494 = vpop.f32.mrb[0].mxu0
        %1495 = vmatprep.mubr.bf16.mxu0 0
        %1496 = vmatmul.mubr.bf16.gmra.mrb[0].mxu0 %v760
        %v1497 = vpop.f32.mrb[0].mxu0
        %v1498 = vadd.f32 %v1209, %v1497
        %v1499 = vpop.f32.mrb[0].mxu0
        %v1500 = vpop.f32.mrb[0].mxu0
        %v1501 = vadd.f32 %v1212, %v1500
        %v1502 = vpop.f32.mrb[0].mxu0
        %1503 = vmatprep.mubr.bf16.mxu0 0
        %1504 = vmatmul.mubr.bf16.gmra.mrb[0].mxu0 %v763
        %v1505 = vpop.f32.mrb[0].mxu0
        %v1506 = vadd.f32 %v1217, %v1505
        %v1507 = vpop.f32.mrb[0].mxu0
        %v1508 = vpop.f32.mrb[0].mxu0
        %v1509 = vadd.f32 %v1220, %v1508
        %v1510 = vpop.f32.mrb[0].mxu0
        %1511 = vmatprep.mubr.bf16.mxu0 0
        %1512 = vmatmul.mubr.bf16.gmra.mrb[0].mxu0 %v766
        %v1513 = vpop.f32.mrb[0].mxu0
        %v1514 = vadd.f32 %v1225, %v1513
        %v1515 = vpop.f32.mrb[0].mxu0
        %v1516 = vpop.f32.mrb[0].mxu0
        %v1517 = vadd.f32 %v1228, %v1516
        %v1518 = vpop.f32.mrb[0].mxu0
        %1519 = vmatprep.mubr.bf16.mxu0 0
        %1520 = vmatmul.mubr.bf16.gmra.mrb[0].mxu0 %v769
        %v1521 = vpop.f32.mrb[0].mxu0
        %v1522 = vadd.f32 %v1233, %v1521
        %v1523 = vpop.f32.mrb[0].mxu0
        %v1524 = vpop.f32.mrb[0].mxu0
        %v1525 = vadd.f32 %v1236, %v1524
        %v1526 = vpop.f32.mrb[0].mxu0
        %1527 = vmatprep.mubr.bf16.mxu0 0
        %1528 = vmatmul.mubr.bf16.gmra.mrb[0].mxu0 %v772
        %v1529 = vpop.f32.mrb[0].mxu0
        %v1530 = vadd.f32 %v1241, %v1529
        %v1531 = vpop.f32.mrb[0].mxu0
        %v1532 = vpop.f32.mrb[0].mxu0
        %v1533 = vadd.f32 %v1244, %v1532
        %v1534 = vpop.f32.mrb[0].mxu0
        %1535 = vmatprep.mubr.bf16.mxu0 0
        %1536 = vmatmul.mubr.bf16.gmra.mrb[0].mxu0 %v775
        %v1537 = vpop.f32.mrb[0].mxu0
        %v1538 = vadd.f32 %v1249, %v1537
        %v1539 = vpop.f32.mrb[0].mxu0
        %v1540 = vpop.f32.mrb[0].mxu0
        %v1541 = vadd.f32 %v1252, %v1540
        %v1542 = vpop.f32.mrb[0].mxu0
        %1543 = vmatprep.mubr.bf16.mxu0 0
        %1544 = vmatmul.mubr.bf16.gmra.mrb[0].mxu0 %v778
        %v1545 = vpop.f32.mrb[0].mxu0
        %v1546 = vadd.f32 %v1257, %v1545
        %v1547 = vpop.f32.mrb[0].mxu0
        %v1548 = vpop.f32.mrb[0].mxu0
        %v1549 = vadd.f32 %v1260, %v1548
        %v1550 = vpop.f32.mrb[0].mxu0
        %1551 = vmatprep.mubr.bf16.mxu0 0
        %1552 = vmatmul.mubr.bf16.gmra.mrb[0].mxu0 %v781
        %v1553 = vpop.f32.mrb[0].mxu0
        %v1554 = vadd.f32 %v1265, %v1553
        %v1555 = vpop.f32.mrb[0].mxu0
        %v1556 = vpop.f32.mrb[0].mxu0
        %v1557 = vadd.f32 %v1268, %v1556
        %v1558 = vpop.f32.mrb[0].mxu0
        %1559 = vmatprep.mubr.bf16.mxu0 0
        %1560 = vmatmul.mubr.bf16.gmra.mrb[0].mxu0 %v784
        %v1561 = vpop.f32.mrb[0].mxu0
        %v1562 = vadd.f32 %v1273, %v1561
        %v1563 = vpop.f32.mrb[0].mxu0
        %v1564 = vpop.f32.mrb[0].mxu0
        %v1565 = vadd.f32 %v1276, %v1564
        %v1566 = vpop.f32.mrb[0].mxu0
        %1567 = vmatprep.mubr.bf16.mxu0 0
        %1568 = vmatmul.mubr.bf16.gmra.mrb[0].mxu0 %v787
        %v1569 = vpop.f32.mrb[0].mxu0
        %v1570 = vadd.f32 %v1281, %v1569
        %v1571 = vpop.f32.mrb[0].mxu0
        %v1572 = vpop.f32.mrb[0].mxu0
        %v1573 = vadd.f32 %v1284, %v1572
        %v1574 = vpop.f32.mrb[0].mxu0
        %1575 = vmatprep.mubr.bf16.mxu0 0
        %1576 = vmatmul.mubr.bf16.gmra.mrb[0].mxu0 %v790
        %v1577 = vpop.f32.mrb[0].mxu0
        %v1578 = vadd.f32 %v1289, %v1577
        %v1579 = vpop.f32.mrb[0].mxu0
        %v1580 = vpop.f32.mrb[0].mxu0
        %v1581 = vadd.f32 %v1292, %v1580
        %v1582 = vpop.f32.mrb[0].mxu0
        %1583 = vmatprep.mubr.bf16.mxu0 0
        %1584 = vmatmul.mubr.bf16.gmra.mrb[0].mxu0 %v793
        %v1585 = vpop.f32.mrb[0].mxu0
        %v1586 = vadd.f32 %v1297, %v1585
        %v1587 = vpop.f32.mrb[0].mxu0
        %v1588 = vpop.f32.mrb[0].mxu0
        %v1589 = vadd.f32 %v1300, %v1588
        %v1590 = vpop.f32.mrb[0].mxu0
        %1591 = vmatprep.mubr.bf16.mxu0 0
        %1592 = vmatmul.mubr.bf16.gmra.mrb[0].mxu0 %v796
        %v1593 = vpop.f32.mrb[0].mxu0
        %v1594 = vadd.f32 %v1305, %v1593
        %v1595 = vpop.f32.mrb[0].mxu0
        %v1596 = vpop.f32.mrb[0].mxu0
        %v1597 = vadd.f32 %v1308, %v1596
        %v1598 = vpop.f32.mrb[0].mxu0
        %1599 = vmatprep.mubr.bf16.mxu0 0
        %1600 = vmatmul.mubr.bf16.gmra.mrb[0].mxu0 %v799
        %v1601 = vpop.f32.mrb[0].mxu0
        %v1602 = vadd.f32 %v1313, %v1601
        %v1603 = vpop.f32.mrb[0].mxu0
        %v1604 = vpop.f32.mrb[0].mxu0
        %v1605 = vadd.f32 %v1316, %v1604
        %v1606 = vpop.f32.mrb[0].mxu0
        %1607 = vmatprep.mubr.bf16.mxu0 0
        %1608 = vmatmul.mubr.bf16.gmra.mrb[0].mxu0 %v802
        %v1609 = vpop.f32.mrb[0].mxu0
        %v1610 = vadd.f32 %v1321, %v1609
        %v1611 = vpop.f32.mrb[0].mxu0
        %v1612 = vpop.f32.mrb[0].mxu0
        %v1613 = vadd.f32 %v1324, %v1612
        %v1614 = vpop.f32.mrb[0].mxu0
        %1615 = vmatprep.mubr.bf16.mxu0 0
        %1616 = vmatmul.mubr.bf16.gmra.mrb[0].mxu0 %v805
        %v1617 = vpop.f32.mrb[0].mxu0
        %v1618 = vadd.f32 %v1329, %v1617
        %v1619 = vpop.f32.mrb[0].mxu0
        %v1620 = vpop.f32.mrb[0].mxu0
        %v1621 = vadd.f32 %v1332, %v1620
        %v1622 = vpop.f32.mrb[0].mxu0
        %1623 = vdwg.mxu0
        %1624 = vst [vmem:[%s204] sm:$0xff] %v1370
        %1625 = vst [vmem:[%s204 + $0x8] sm:$0xff] %v1373
        %1626 = vst [vmem:[%s204 + $0x10] sm:$0xff] %v1378
        %1627 = vst [vmem:[%s204 + $0x18] sm:$0xff] %v1381
        %1628 = vst [vmem:[%s204 + $0x20] sm:$0xff] %v1386
        %1629 = vst [vmem:[%s204 + $0x28] sm:$0xff] %v1389
        %1630 = vst [vmem:[%s204 + $0x30] sm:$0xff] %v1394
        %1631 = vst [vmem:[%s204 + $0x38] sm:$0xff] %v1397
        %1632 = vst [vmem:[%s204 + $0x40] sm:$0xff] %v1402
        %1633 = vst [vmem:[%s204 + $0x48] sm:$0xff] %v1405
        %1634 = vst [vmem:[%s204 + $0x50] sm:$0xff] %v1410
        %1635 = vst [vmem:[%s204 + $0x58] sm:$0xff] %v1413
        %1636 = vst [vmem:[%s204 + $0x60] sm:$0xff] %v1418
        %1637 = vst [vmem:[%s204 + $0x68] sm:$0xff] %v1421
        %1638 = vst [vmem:[%s204 + $0x70] sm:$0xff] %v1426
        %1639 = vst [vmem:[%s204 + $0x78] sm:$0xff] %v1429
        %1640 = vst [vmem:[%s204 + $0x80] sm:$0xff] %v1434
        %1641 = vst [vmem:[%s204 + $0x88] sm:$0xff] %v1437
        %1642 = vst [vmem:[%s204 + $0x90] sm:$0xff] %v1442
        %1643 = vst [vmem:[%s204 + $0x98] sm:$0xff] %v1445
        %1644 = vst [vmem:[%s204 + $0xa0] sm:$0xff] %v1450
        %1645 = vst [vmem:[%s204 + $0xa8] sm:$0xff] %v1453
        %1646 = vst [vmem:[%s204 + $0xb0] sm:$0xff] %v1458
        %1647 = vst [vmem:[%s204 + $0xb8] sm:$0xff] %v1461
        %1648 = vst [vmem:[%s204 + $0xc0] sm:$0xff] %v1466
        %1649 = vst [vmem:[%s204 + $0xc8] sm:$0xff] %v1469
        %1650 = vst [vmem:[%s204 + $0xd0] sm:$0xff] %v1474
        %1651 = vst [vmem:[%s204 + $0xd8] sm:$0xff] %v1477
        %1652 = vst [vmem:[%s204 + $0xe0] sm:$0xff] %v1482
        %1653 = vst [vmem:[%s204 + $0xe8] sm:$0xff] %v1485
        %1654 = vst [vmem:[%s204 + $0xf0] sm:$0xff] %v1490
        %1655 = vst [vmem:[%s204 + $0xf8] sm:$0xff] %v1493
        %1656 = vst [vmem:[%s204 + $0x100] sm:$0xff] %v1498
        %1657 = vst [vmem:[%s204 + $0x108] sm:$0xff] %v1501
        %1658 = vst [vmem:[%s204 + $0x110] sm:$0xff] %v1506
        %1659 = vst [vmem:[%s204 + $0x118] sm:$0xff] %v1509
        %1660 = vst [vmem:[%s204 + $0x120] sm:$0xff] %v1514
        %1661 = vst [vmem:[%s204 + $0x128] sm:$0xff] %v1517
        %1662 = vst [vmem:[%s204 + $0x130] sm:$0xff] %v1522
        %1663 = vst [vmem:[%s204 + $0x138] sm:$0xff] %v1525
        %1664 = vst [vmem:[%s204 + $0x140] sm:$0xff] %v1530
        %1665 = vst [vmem:[%s204 + $0x148] sm:$0xff] %v1533
        %1666 = vst [vmem:[%s204 + $0x150] sm:$0xff] %v1538
        %1667 = vst [vmem:[%s204 + $0x158] sm:$0xff] %v1541
        %1668 = vst [vmem:[%s204 + $0x160] sm:$0xff] %v1546
        %1669 = vst [vmem:[%s204 + $0x168] sm:$0xff] %v1549
        %1670 = vst [vmem:[%s204 + $0x170] sm:$0xff] %v1554
        %1671 = vst [vmem:[%s204 + $0x178] sm:$0xff] %v1557
        %1672 = vst [vmem:[%s204 + $0x180] sm:$0xff] %v1562
        %1673 = vst [vmem:[%s204 + $0x188] sm:$0xff] %v1565
        %1674 = vst [vmem:[%s204 + $0x190] sm:$0xff] %v1570
        %1675 = vst [vmem:[%s204 + $0x198] sm:$0xff] %v1573
        %1676 = vst [vmem:[%s204 + $0x1a0] sm:$0xff] %v1578
        %1677 = vst [vmem:[%s204 + $0x1a8] sm:$0xff] %v1581
        %1678 = vst [vmem:[%s204 + $0x1b0] sm:$0xff] %v1586
        %1679 = vst [vmem:[%s204 + $0x1b8] sm:$0xff] %v1589
        %1680 = vst [vmem:[%s204 + $0x1c0] sm:$0xff] %v1594
        %1681 = vst [vmem:[%s204 + $0x1c8] sm:$0xff] %v1597
        %1682 = vst [vmem:[%s204 + $0x1d0] sm:$0xff] %v1602
        %1683 = vst [vmem:[%s204 + $0x1d8] sm:$0xff] %v1605
        %1684 = vst [vmem:[%s204 + $0x1e0] sm:$0xff] %v1610
        %1685 = vst [vmem:[%s204 + $0x1e8] sm:$0xff] %v1613
        %1686 = vst [vmem:[%s204 + $0x1f0] sm:$0xff] %v1618
        %1687 = vst [vmem:[%s204 + $0x1f8] sm:$0xff] %v1621
        %s1688 = sand.u32 %s97, 1
        %s1689 = scalar_lea.sflag [#allocation4], %s1688
        %s1690 = sand.u32 %s97, 1
        %s1691 = smul.addr %s1690, 512
        %s1692 = scalar_lea.vmem [#allocation7], %s1691
        // Predicated region
        $region41: #{tpu_custom_call.1} parent=31 // pred_check
          %p1693 = pneg %p107
        $region42: #{tpu_custom_call.1} parent=31 // pred_check_branch
          %1695 = sbr.rel (%p1693) target = $region44
        $region43: #{tpu_custom_call.1} parent=31 // pred_region
          %s1696 = smul.u32 64, %s21
          %s1698 = ssub.s32 8192, 8192
          %1699 = vsyncadd %s1689, %s1698
          %s1700 = smul.addr %s1696, 128
          %s1701 = scalar_lea.hbm %s3, %s1700
          %s1702 = sshll.u32 %s1692, 4
          %s1703 = int_to_ptr.vmem [resolvable:$true] %s1702
          %1708 = dma.vmem_to_hbm [thread:$0]  %s1703, 8192, %s1701, %s1689, 128, 128, 8
        $region44: #{tpu_custom_call.1} parent=31 // pred_fallthru
          _
      $region32: #{tpu_custom_call.1} parent=5 // pred_fallthru
        _
      %p1709 = scmp.le.s32.totalorder 2, %s16
      // Predicated region
      $region45: #{tpu_custom_call.1} parent=5 // pred_check
        %p1710 = pneg %p1709
      $region46: #{tpu_custom_call.1} parent=5 // pred_check_branch
        %1712 = sbr.rel (%p1710) target = $region48
      $region47: #{tpu_custom_call.1} parent=5 // pred_region
        %s1713 = ssub.s32 %s16, 2
        // Predicated region
        $region49: #{tpu_custom_call.1} parent=47 // pred_check
          %p1714 = pneg %p113
        $region50: #{tpu_custom_call.1} parent=47 // pred_check_branch
          %1716 = sbr.rel (%p1714) target = $region52
        $region51: #{tpu_custom_call.1} parent=47 // pred_region
          %s1717 = sand.u32 %s98, 1
          %s1718 = scalar_lea.sflag [#allocation4], %s1717
          %s1719 = sand.u32 %s98, 1
          %s1720 = smul.addr %s1719, 512
          %s1721 = scalar_lea.vmem [#allocation7], %s1720
          %1722 = dma.done %s1718, 8192
        $region52: #{tpu_custom_call.1} parent=47 // pred_fallthru
          _
      $region48: #{tpu_custom_call.1} parent=5 // pred_fallthru
        _
    $region6: #{tpu_custom_call.1} parent=1 // loop_footer
      %s20 = sadd.s32 1, %s16
    $region7: #{tpu_custom_call.1} parent=1 // loop_footer_branch
      %15 = sbr.rel target = $region3
    $region8: #{tpu_custom_call.1} parent=1 // loop_exit
      _
    %1723 = vsyncpa [#allocation3], 1
    %s1724 = scalar_lea.sflag [#allocation3], 1
    %1725 = vsyncpa %s1724, 1
    %1726 = vsyncpa [#allocation6], 1
    %1727 = vsyncpa [#allocation4], 1
    %s1728 = scalar_lea.sflag [#allocation4], 1
    %1729 = vsyncpa %s1728, 1

</llo_original>
